<compile_context>
chip_gen: v5e
topology: v5e:2x2
jax: 0.10.0
libtpu: 0.0.40
codegen_flags: <defaults>
</compile_context>

<pallas_src>
import functools
import math

import jax
import jax.numpy as jnp
from jax.experimental import pallas as pl
from jax.experimental.pallas import tpu as pltpu

VMEM = pl.BlockSpec(memory_space=pltpu.MemorySpace.VMEM)
ANY = pl.BlockSpec(memory_space=pl.ANY)


# ------------------------------ fused kernel --------------------------------

def _lstm_baseline_kernel(x_ref, wih1_ref, b1_ref, whh1_hbm, w2_hbm, b2_ref,
                          wfc1_ref, bfc1_ref, wfc2_ref, bfc2_ref,
                          out_ref,
                          whh1_vmem, w2_vmem, gx1_ref, dma_sem,
                          *, batch, bp, seq_len, h1_dim, h2_dim, in_dim):
    B, Bp, S, H1, H2, E = batch, bp, seq_len, h1_dim, h2_dim, in_dim
    G1, G2 = 4 * H1, 4 * H2

    # Kick off the big recurrent-weight DMAs immediately so they overlap with
    # the input projection / gate-scale setup below.
    cp1 = pltpu.make_async_copy(whh1_hbm, whh1_vmem, dma_sem.at[0])
    cp2 = pltpu.make_async_copy(w2_hbm, w2_vmem, dma_sem.at[1])
    cp1.start()
    cp2.start()

    # ---- hoisted LSTM1 input projection on the VPU (K=4 would waste MXU) ---
    # x_ref: [S, Bp, E] time-major, batch padded to 8 sublanes.
    x3 = x_ref[...]                                            # [S, Bp, E]
    wih1 = wih1_ref[...]                                       # [E, G1]
    b1_3d = b1_ref[...].reshape(1, 1, G1)
    acc = x3[:, :, 0:1] * wih1[0].reshape(1, 1, G1) + b1_3d
    for e in range(1, E):
        acc = acc + x3[:, :, e:e + 1] * wih1[e].reshape(1, 1, G1)
    gx1_ref[...] = acc                                         # [S, Bp, G1]

    # Gate scales (hoisted): sigmoid(z) = 0.5*tanh(z/2) + 0.5, so
    #   act = s * (tanh(s*z) - 1) + 1,  s = 1 on tanh ("g") lanes, 0.5 else.
    # PyTorch gate order along the 4H axis is i, f, g, o.
    lane1 = jax.lax.broadcasted_iota(jnp.int32, (Bp, G1), 1)
    s1 = jnp.where((lane1 >= 2 * H1) & (lane1 < 3 * H1), 1.0, 0.5)
    lane2 = jax.lax.broadcasted_iota(jnp.int32, (Bp, G2), 1)
    s2 = jnp.where((lane2 >= 2 * H2) & (lane2 < 3 * H2), 1.0, 0.5)

    b2 = b2_ref[...]                                           # [1, G2]

    h1 = jnp.zeros((Bp, H1), jnp.float32)
    c1 = jnp.zeros((Bp, H1), jnp.float32)
    h2 = jnp.zeros((Bp, H2), jnp.float32)
    c2 = jnp.zeros((Bp, H2), jnp.float32)

    # Recurrent weights must be resident before the first step.
    cp1.wait()
    cp2.wait()

    # Fully unrolled recurrence (S is a small static constant).  Both LSTMs are
    # fused into one time loop (LSTM2 consumes LSTM1's h of the same step).
    for t in range(S):
        # ---------------- LSTM1 step ----------------
        gates1 = gx1_ref[t] + jnp.dot(h1.astype(jnp.bfloat16), whh1_vmem[...],
                                      preferred_element_type=jnp.float32)
        a1 = s1 * (jnp.tanh(gates1 * s1) - 1.0) + 1.0          # [Bp, G1]
        i1 = a1[:, 0:H1]
        f1 = a1[:, H1:2 * H1]
        g1 = a1[:, 2 * H1:3 * H1]
        o1 = a1[:, 3 * H1:4 * H1]
        c1 = f1 * c1 + i1 * g1
        h1 = o1 * jnp.tanh(c1)

        # ------- LSTM2 step: single fused matmul over concat(h1, h2) -------
        hcat = jnp.concatenate([h1, h2], axis=1).astype(jnp.bfloat16)
        gates2 = jnp.dot(hcat, w2_vmem[...],
                         preferred_element_type=jnp.float32) + b2
        a2 = s2 * (jnp.tanh(gates2 * s2) - 1.0) + 1.0          # [Bp, G2]
        i2 = a2[:, 0:H2]
        f2 = a2[:, H2:2 * H2]
        g2 = a2[:, 2 * H2:3 * H2]
        o2 = a2[:, 3 * H2:4 * H2]
        c2 = f2 * c2 + i2 * g2
        h2 = o2 * jnp.tanh(c2)

    # ---- classifier head: fc1 -> ReLU -> Dropout(eval: identity) -> fc2 ----
    y = jnp.dot(h2, wfc1_ref[...], preferred_element_type=jnp.float32) + bfc1_ref[...]
    y = jnp.maximum(y, 0.0)
    logits = jnp.dot(y, wfc2_ref[...], preferred_element_type=jnp.float32) + bfc2_ref[...]
    out_ref[...] = logits[0:B, :]                              # drop padded rows


def lstm_baseline_forward(params, x):
    """x: [batch, input_size, seq_len] (PyTorch convention)."""
    B, E, S = x.shape
    H1 = params["lstm1"]["whh"].shape[0]
    H2 = params["lstm2"]["whh"].shape[0]
    num_classes = params["fc2"]["w"].shape[1]
    Bp = 8  # pad batch to one full sublane tile
    assert B <= Bp

    # Tiny layout prep (fused by XLA): time-major, batch padded to 8.
    x_t = jnp.transpose(x, (2, 0, 1)).astype(jnp.float32)      # [S, B, E]
    x_p = jnp.pad(x_t, ((0, 0), (0, Bp - B), (0, 0)))          # [S, Bp, E]

    kernel = functools.partial(_lstm_baseline_kernel, batch=B, bp=Bp,
                               seq_len=S, h1_dim=H1, h2_dim=H2, in_dim=E)
    return pl.pallas_call(
        kernel,
        out_shape=jax.ShapeDtypeStruct((B, num_classes), jnp.float32),
        in_specs=[VMEM, VMEM, VMEM,        # x, wih1, b1
                  ANY, ANY,                # whh1 (bf16), fused W2 (bf16) - manual DMA
                  VMEM,                    # b2
                  VMEM, VMEM, VMEM, VMEM], # fc1 w/b, fc2 w/b
        out_specs=VMEM,
        scratch_shapes=[
            pltpu.VMEM((H1, 4 * H1), jnp.bfloat16),        # whh1 landing buffer
            pltpu.VMEM((H1 + H2, 4 * H2), jnp.bfloat16),   # fused W2 landing buffer
            pltpu.VMEM((S, Bp, 4 * H1), jnp.float32),      # precomputed x @ W_ih1 + b1
            pltpu.SemaphoreType.DMA((2,)),
        ],
    )(x_p,
      params["lstm1"]["wih"], params["lstm1"]["b"],
      params["lstm1"]["whh_bf16"], params["lstm2"]["w_bf16"],
      params["lstm2"]["b"],
      params["fc1"]["w"], params["fc1"]["b"],
      params["fc2"]["w"], params["fc2"]["b"])


# ------------------------------ parameters ----------------------------------

def _uniform(key, shape, bound):
    return jax.random.uniform(key, shape, jnp.float32, -bound, bound)


def init_params(key, input_size, hidden_size_1, hidden_size_2, num_classes):
    keys = iter(jax.random.split(key, 16))

    def lstm(in_dim, hid):
        k = 1.0 / math.sqrt(hid)
        # stored transposed: [in, 4H] / [H, 4H]; column order i, f, g, o
        wih = _uniform(next(keys), (in_dim, 4 * hid), k)
        whh = _uniform(next(keys), (hid, 4 * hid), k)
        # fused bias = b_ih + b_hh
        b = (_uniform(next(keys), (1, 4 * hid), k)
             + _uniform(next(keys), (1, 4 * hid), k))
        return wih, whh, b

    wih1, whh1, b1 = lstm(input_size, hidden_size_1)
    wih2, whh2, b2 = lstm(hidden_size_1, hidden_size_2)

    def lin(din, dout):
        k = 1.0 / math.sqrt(din)
        return {"w": _uniform(next(keys), (din, dout), k),
                "b": _uniform(next(keys), (1, dout), k)}

    return {
        # f32 copies feed the pure-JAX reference; bf16 copies feed the MXU.
        "lstm1": {"wih": wih1, "whh": whh1, "b": b1,
                  "whh_bf16": whh1.astype(jnp.bfloat16)},
        "lstm2": {"wih": wih2, "whh": whh2, "b": b2,
                  "w_bf16": jnp.concatenate([wih2, whh2],
                                            axis=0).astype(jnp.bfloat16)},
        "fc1": lin(hidden_size_2, 32),
        "fc2": lin(32, num_classes),
    }


# --------------------------- pure-JAX reference ------------------------------

def _reference_forward(params, x):
    x = jnp.transpose(x, (0, 2, 1)).astype(jnp.float32)   # [B, S, E]

    def run_lstm(seq, wih, whh, b, H):
        Bsz = seq.shape[0]

        def step(carry, x_t):
            h, c = carry
            gates = x_t @ wih + h @ whh + b
            i = jax.nn.sigmoid(gates[:, 0:H])
            f = jax.nn.sigmoid(gates[:, H:2 * H])
            g = jnp.tanh(gates[:, 2 * H:3 * H])
            o = jax.nn.sigmoid(gates[:, 3 * H:4 * H])
            c = f * c + i * g
            h = o * jnp.tanh(c)
            return (h, c), h

        init = (jnp.zeros((Bsz, H), jnp.float32), jnp.zeros((Bsz, H), jnp.float32))
        (h_last, _), hs = jax.lax.scan(step, init, jnp.transpose(seq, (1, 0, 2)))
        return jnp.transpose(hs, (1, 0, 2)), h_last

    out1, _ = run_lstm(x, params["lstm1"]["wih"], params["lstm1"]["whh"],
                       params["lstm1"]["b"], params["lstm1"]["whh"].shape[0])
    _, h_n = run_lstm(out1, params["lstm2"]["wih"], params["lstm2"]["whh"],
                      params["lstm2"]["b"], params["lstm2"]["whh"].shape[0])
    y = jax.nn.relu(h_n @ params["fc1"]["w"] + params["fc1"]["b"])
    # Dropout(0.2) is identity in eval mode.
    return y @ params["fc2"]["w"] + params["fc2"]["b"]


# --------------------------------- main --------------------------------------

if __name__ == "__main__":
    batch = 2
    input_size = 4
    seq_len = 8
    hidden_size_1 = 128
    hidden_size_2 = 64
    num_classes = 5

    key = jax.random.PRNGKey(0)
    pkey, xkey = jax.random.split(key)
    params = init_params(pkey, input_size, hidden_size_1, hidden_size_2,
                         num_classes)
    # input layout matches the PyTorch module: [batch, input_size, seq_len]
    x = jax.random.normal(xkey, (batch, input_size, seq_len), jnp.float32)

    fwd = jax.jit(lstm_baseline_forward)
    out = fwd(params, x)
    jax.block_until_ready(out)

    assert out.shape == (batch, num_classes), out.shape
    assert bool(jnp.all(jnp.isfinite(out)))

    ref = _reference_forward(params, x)
    assert bool(jnp.allclose(out, ref, rtol=1e-2, atol=1e-2)), (
        float(jnp.max(jnp.abs(out - ref))))

    print("KERNEL_OK")
</pallas_src>

<mosaic_0001>
module attributes {stable_mosaic.version = 11 : i64} {
  func.func @_lstm_baseline_kernel(%arg0: memref<8x8x4xf32, #tpu.memory_space<vmem>>, %arg1: memref<4x512xf32, #tpu.memory_space<vmem>>, %arg2: memref<1x512xf32, #tpu.memory_space<vmem>>, %arg3: memref<128x512xbf16, #tpu.memory_space<any>>, %arg4: memref<192x256xbf16, #tpu.memory_space<any>>, %arg5: memref<1x256xf32, #tpu.memory_space<vmem>>, %arg6: memref<64x32xf32, #tpu.memory_space<vmem>>, %arg7: memref<1x32xf32, #tpu.memory_space<vmem>>, %arg8: memref<32x5xf32, #tpu.memory_space<vmem>>, %arg9: memref<1x5xf32, #tpu.memory_space<vmem>>, %arg10: memref<2x5xf32, #tpu.memory_space<vmem>>, %arg11: memref<128x512xbf16, #tpu.memory_space<vmem>>, %arg12: memref<192x256xbf16, #tpu.memory_space<vmem>>, %arg13: memref<8x8x512xf32, #tpu.memory_space<vmem>>, %arg14: memref<2x!tpu.dma_semaphore, #tpu.memory_space<semaphore_mem>>) attributes {dimension_semantics = [], scalar_prefetch = 0 : i64, scratch_operands = 4 : i64, tpu.core_type = #tpu.core_type<tc>} {
    %c0_i32 = arith.constant 0 : i32
    %0 = tpu.memref_slice %arg14[%c0_i32] : memref<2x!tpu.dma_semaphore, #tpu.memory_space<semaphore_mem>> -> memref<1x!tpu.dma_semaphore, #tpu.memory_space<semaphore_mem>>
    %1 = tpu.memref_squeeze %0 : memref<1x!tpu.dma_semaphore, #tpu.memory_space<semaphore_mem>> -> memref<!tpu.dma_semaphore, #tpu.memory_space<semaphore_mem>>
    tpu.enqueue_dma source(%arg3 : memref<128x512xbf16, #tpu.memory_space<any>>) target(%arg11 : memref<128x512xbf16, #tpu.memory_space<vmem>>) target_semaphore(%1 : memref<!tpu.dma_semaphore, #tpu.memory_space<semaphore_mem>>)
    %c1_i32 = arith.constant 1 : i32
    %2 = tpu.memref_slice %arg14[%c1_i32] : memref<2x!tpu.dma_semaphore, #tpu.memory_space<semaphore_mem>> -> memref<1x!tpu.dma_semaphore, #tpu.memory_space<semaphore_mem>>
    %3 = tpu.memref_squeeze %2 : memref<1x!tpu.dma_semaphore, #tpu.memory_space<semaphore_mem>> -> memref<!tpu.dma_semaphore, #tpu.memory_space<semaphore_mem>>
    tpu.enqueue_dma source(%arg4 : memref<192x256xbf16, #tpu.memory_space<any>>) target(%arg12 : memref<192x256xbf16, #tpu.memory_space<vmem>>) target_semaphore(%3 : memref<!tpu.dma_semaphore, #tpu.memory_space<semaphore_mem>>)
    %c0 = arith.constant 0 : index
    %c0_0 = arith.constant 0 : index
    %c0_1 = arith.constant 0 : index
    %4 = vector.load %arg0[%c0, %c0_0, %c0_1] : memref<8x8x4xf32, #tpu.memory_space<vmem>>, vector<8x8x4xf32>
    %c0_2 = arith.constant 0 : index
    %c0_3 = arith.constant 0 : index
    %5 = vector.load %arg1[%c0_2, %c0_3] : memref<4x512xf32, #tpu.memory_space<vmem>>, vector<4x512xf32>
    %c0_4 = arith.constant 0 : index
    %c0_5 = arith.constant 0 : index
    %6 = vector.load %arg2[%c0_4, %c0_5] : memref<1x512xf32, #tpu.memory_space<vmem>>, vector<1x512xf32>
    %7 = vector.shape_cast %6 : vector<1x512xf32> to vector<1x1x512xf32>
    %8 = vector.extract_strided_slice %4 {offsets = [0, 0, 0], sizes = [8, 8, 1], strides = [1, 1, 1]} : vector<8x8x4xf32> to vector<8x8x1xf32>
    %9 = vector.extract_strided_slice %5 {offsets = [0, 0], sizes = [1, 512], strides = [1, 1]} : vector<4x512xf32> to vector<1x512xf32>
    %10 = vector.shape_cast %9 : vector<1x512xf32> to vector<512xf32>
    %11 = vector.shape_cast %10 : vector<512xf32> to vector<1x1x512xf32>
    %12 = vector.broadcast %8 : vector<8x8x1xf32> to vector<8x8x512xf32>
    %13 = vector.broadcast %11 : vector<1x1x512xf32> to vector<8x8x512xf32>
    %14 = arith.mulf %12, %13 : vector<8x8x512xf32>
    %15 = vector.broadcast %7 : vector<1x1x512xf32> to vector<8x8x512xf32>
    %16 = arith.addf %14, %15 : vector<8x8x512xf32>
    %17 = vector.extract_strided_slice %4 {offsets = [0, 0, 1], sizes = [8, 8, 1], strides = [1, 1, 1]} : vector<8x8x4xf32> to vector<8x8x1xf32>
    %18 = vector.extract_strided_slice %5 {offsets = [1, 0], sizes = [1, 512], strides = [1, 1]} : vector<4x512xf32> to vector<1x512xf32>
    %19 = vector.shape_cast %18 : vector<1x512xf32> to vector<512xf32>
    %20 = vector.shape_cast %19 : vector<512xf32> to vector<1x1x512xf32>
    %21 = vector.broadcast %17 : vector<8x8x1xf32> to vector<8x8x512xf32>
    %22 = vector.broadcast %20 : vector<1x1x512xf32> to vector<8x8x512xf32>
    %23 = arith.mulf %21, %22 : vector<8x8x512xf32>
    %24 = arith.addf %16, %23 : vector<8x8x512xf32>
    %25 = vector.extract_strided_slice %4 {offsets = [0, 0, 2], sizes = [8, 8, 1], strides = [1, 1, 1]} : vector<8x8x4xf32> to vector<8x8x1xf32>
    %26 = vector.extract_strided_slice %5 {offsets = [2, 0], sizes = [1, 512], strides = [1, 1]} : vector<4x512xf32> to vector<1x512xf32>
    %27 = vector.shape_cast %26 : vector<1x512xf32> to vector<512xf32>
    %28 = vector.shape_cast %27 : vector<512xf32> to vector<1x1x512xf32>
    %29 = vector.broadcast %25 : vector<8x8x1xf32> to vector<8x8x512xf32>
    %30 = vector.broadcast %28 : vector<1x1x512xf32> to vector<8x8x512xf32>
    %31 = arith.mulf %29, %30 : vector<8x8x512xf32>
    %32 = arith.addf %24, %31 : vector<8x8x512xf32>
    %33 = vector.extract_strided_slice %4 {offsets = [0, 0, 3], sizes = [8, 8, 1], strides = [1, 1, 1]} : vector<8x8x4xf32> to vector<8x8x1xf32>
    %34 = vector.extract_strided_slice %5 {offsets = [3, 0], sizes = [1, 512], strides = [1, 1]} : vector<4x512xf32> to vector<1x512xf32>
    %35 = vector.shape_cast %34 : vector<1x512xf32> to vector<512xf32>
    %36 = vector.shape_cast %35 : vector<512xf32> to vector<1x1x512xf32>
    %37 = vector.broadcast %33 : vector<8x8x1xf32> to vector<8x8x512xf32>
    %38 = vector.broadcast %36 : vector<1x1x512xf32> to vector<8x8x512xf32>
    %39 = arith.mulf %37, %38 : vector<8x8x512xf32>
    %40 = arith.addf %32, %39 : vector<8x8x512xf32>
    %c0_6 = arith.constant 0 : index
    %c0_7 = arith.constant 0 : index
    %c0_8 = arith.constant 0 : index
    %41 = vector.load %arg13[%c0_6, %c0_7, %c0_8] : memref<8x8x512xf32, #tpu.memory_space<vmem>>, vector<8x8x512xf32>
    tpu.vector_store %arg13[%c0_6, %c0_7, %c0_8], %40 {strides = array<i32>} : memref<8x8x512xf32, #tpu.memory_space<vmem>>, vector<8x8x512xf32>,
    %42 = tpu.iota {dimensions = array<i32: 1>} : vector<8x512xi32>
    %c256_i32 = arith.constant 256 : i32
    %43 = vector.broadcast %c256_i32 : i32 to vector<8x512xi32>
    %44 = arith.cmpi sge, %42, %43 : vector<8x512xi32>
    %c384_i32 = arith.constant 384 : i32
    %45 = vector.broadcast %c384_i32 : i32 to vector<8x512xi32>
    %46 = arith.cmpi slt, %42, %45 : vector<8x512xi32>
    %47 = arith.andi %44, %46 : vector<8x512xi1>
    %cst = arith.constant 1.000000e+00 : f32
    %cst_9 = arith.constant 5.000000e-01 : f32
    %48 = vector.broadcast %cst : f32 to vector<8x512xf32>
    %49 = vector.broadcast %cst_9 : f32 to vector<8x512xf32>
    %50 = arith.select %47, %48, %49 : vector<8x512xi1>, vector<8x512xf32>
    %51 = tpu.iota {dimensions = array<i32: 1>} : vector<8x256xi32>
    %c128_i32 = arith.constant 128 : i32
    %52 = vector.broadcast %c128_i32 : i32 to vector<8x256xi32>
    %53 = arith.cmpi sge, %51, %52 : vector<8x256xi32>
    %c192_i32 = arith.constant 192 : i32
    %54 = vector.broadcast %c192_i32 : i32 to vector<8x256xi32>
    %55 = arith.cmpi slt, %51, %54 : vector<8x256xi32>
    %56 = arith.andi %53, %55 : vector<8x256xi1>
    %cst_10 = arith.constant 1.000000e+00 : f32
    %cst_11 = arith.constant 5.000000e-01 : f32
    %57 = vector.broadcast %cst_10 : f32 to vector<8x256xf32>
    %58 = vector.broadcast %cst_11 : f32 to vector<8x256xf32>
    %59 = arith.select %56, %57, %58 : vector<8x256xi1>, vector<8x256xf32>
    %c0_12 = arith.constant 0 : index
    %c0_13 = arith.constant 0 : index
    %60 = vector.load %arg5[%c0_12, %c0_13] : memref<1x256xf32, #tpu.memory_space<vmem>>, vector<1x256xf32>
    %cst_14 = arith.constant 0.000000e+00 : f32
    %61 = vector.broadcast %cst_14 : f32 to vector<8x128xf32>
    %cst_15 = arith.constant 0.000000e+00 : f32
    %62 = vector.broadcast %cst_15 : f32 to vector<8x128xf32>
    %cst_16 = arith.constant 0.000000e+00 : f32
    %63 = vector.broadcast %cst_16 : f32 to vector<8x64xf32>
    %cst_17 = arith.constant 0.000000e+00 : f32
    %64 = vector.broadcast %cst_17 : f32 to vector<8x64xf32>
    %c0_i32_18 = arith.constant 0 : i32
    %65 = tpu.memref_slice %arg14[%c0_i32_18] : memref<2x!tpu.dma_semaphore, #tpu.memory_space<semaphore_mem>> -> memref<1x!tpu.dma_semaphore, #tpu.memory_space<semaphore_mem>>
    %66 = tpu.memref_squeeze %65 : memref<1x!tpu.dma_semaphore, #tpu.memory_space<semaphore_mem>> -> memref<!tpu.dma_semaphore, #tpu.memory_space<semaphore_mem>>
    tpu.wait_dma2 semaphore(%66 : memref<!tpu.dma_semaphore, #tpu.memory_space<semaphore_mem>>) src(%arg3 : memref<128x512xbf16, #tpu.memory_space<any>>) dst(%arg11 : memref<128x512xbf16, #tpu.memory_space<vmem>>)
    %c1_i32_19 = arith.constant 1 : i32
    %67 = tpu.memref_slice %arg14[%c1_i32_19] : memref<2x!tpu.dma_semaphore, #tpu.memory_space<semaphore_mem>> -> memref<1x!tpu.dma_semaphore, #tpu.memory_space<semaphore_mem>>
    %68 = tpu.memref_squeeze %67 : memref<1x!tpu.dma_semaphore, #tpu.memory_space<semaphore_mem>> -> memref<!tpu.dma_semaphore, #tpu.memory_space<semaphore_mem>>
    tpu.wait_dma2 semaphore(%68 : memref<!tpu.dma_semaphore, #tpu.memory_space<semaphore_mem>>) src(%arg4 : memref<192x256xbf16, #tpu.memory_space<any>>) dst(%arg12 : memref<192x256xbf16, #tpu.memory_space<vmem>>)
    %c0_20 = arith.constant 0 : index
    %c0_21 = arith.constant 0 : index
    %c0_22 = arith.constant 0 : index
    %69 = vector.load %arg13[%c0_20, %c0_21, %c0_22] : memref<8x8x512xf32, #tpu.memory_space<vmem>>, vector<1x8x512xf32>
    %70 = vector.shape_cast %69 : vector<1x8x512xf32> to vector<8x512xf32>
    %71 = arith.truncf %61 : vector<8x128xf32> to vector<8x128xbf16>
    %c0_23 = arith.constant 0 : index
    %c0_24 = arith.constant 0 : index
    %72 = vector.load %arg11[%c0_23, %c0_24] : memref<128x512xbf16, #tpu.memory_space<vmem>>, vector<128x512xbf16>
    %cst_25 = arith.constant dense<0.000000e+00> : vector<8x512xf32>
    %73 = tpu.matmul %71, %72, %cst_25 {dimension_numbers = #tpu.dot_dimension_numbers<[1], [0], [0], [1], [0, 0, 1, 1], [], []>} : vector<8x128xbf16>, vector<128x512xbf16>, vector<8x512xf32> -> vector<8x512xf32>
    %74 = arith.addf %70, %73 : vector<8x512xf32>
    %75 = arith.mulf %74, %50 : vector<8x512xf32>
    %76 = math.tanh %75 : vector<8x512xf32>
    %cst_26 = arith.constant 1.000000e+00 : f32
    %77 = vector.broadcast %cst_26 : f32 to vector<8x512xf32>
    %78 = arith.subf %76, %77 : vector<8x512xf32>
    %79 = arith.mulf %50, %78 : vector<8x512xf32>
    %cst_27 = arith.constant 1.000000e+00 : f32
    %80 = vector.broadcast %cst_27 : f32 to vector<8x512xf32>
    %81 = arith.addf %79, %80 : vector<8x512xf32>
    %82 = vector.extract_strided_slice %81 {offsets = [0, 0], sizes = [8, 128], strides = [1, 1]} : vector<8x512xf32> to vector<8x128xf32>
    %83 = vector.extract_strided_slice %81 {offsets = [0, 128], sizes = [8, 128], strides = [1, 1]} : vector<8x512xf32> to vector<8x128xf32>
    %84 = vector.extract_strided_slice %81 {offsets = [0, 256], sizes = [8, 128], strides = [1, 1]} : vector<8x512xf32> to vector<8x128xf32>
    %85 = vector.extract_strided_slice %81 {offsets = [0, 384], sizes = [8, 128], strides = [1, 1]} : vector<8x512xf32> to vector<8x128xf32>
    %86 = arith.mulf %83, %62 : vector<8x128xf32>
    %87 = arith.mulf %82, %84 : vector<8x128xf32>
    %88 = arith.addf %86, %87 : vector<8x128xf32>
    %89 = math.tanh %88 : vector<8x128xf32>
    %90 = arith.mulf %85, %89 : vector<8x128xf32>
    %91 = tpu.concatenate %90, %63 in 1 : vector<8x128xf32>, vector<8x64xf32> -> vector<8x192xf32>
    %92 = arith.truncf %91 : vector<8x192xf32> to vector<8x192xbf16>
    %c0_28 = arith.constant 0 : index
    %c0_29 = arith.constant 0 : index
    %93 = vector.load %arg12[%c0_28, %c0_29] : memref<192x256xbf16, #tpu.memory_space<vmem>>, vector<192x256xbf16>
    %cst_30 = arith.constant dense<0.000000e+00> : vector<8x256xf32>
    %94 = tpu.matmul %92, %93, %cst_30 {dimension_numbers = #tpu.dot_dimension_numbers<[1], [0], [0], [1], [0, 0, 1, 1], [], []>} : vector<8x192xbf16>, vector<192x256xbf16>, vector<8x256xf32> -> vector<8x256xf32>
    %95 = vector.broadcast %60 : vector<1x256xf32> to vector<8x256xf32>
    %96 = arith.addf %94, %95 : vector<8x256xf32>
    %97 = arith.mulf %96, %59 : vector<8x256xf32>
    %98 = math.tanh %97 : vector<8x256xf32>
    %cst_31 = arith.constant 1.000000e+00 : f32
    %99 = vector.broadcast %cst_31 : f32 to vector<8x256xf32>
    %100 = arith.subf %98, %99 : vector<8x256xf32>
    %101 = arith.mulf %59, %100 : vector<8x256xf32>
    %cst_32 = arith.constant 1.000000e+00 : f32
    %102 = vector.broadcast %cst_32 : f32 to vector<8x256xf32>
    %103 = arith.addf %101, %102 : vector<8x256xf32>
    %104 = vector.extract_strided_slice %103 {offsets = [0, 0], sizes = [8, 64], strides = [1, 1]} : vector<8x256xf32> to vector<8x64xf32>
    %105 = vector.extract_strided_slice %103 {offsets = [0, 64], sizes = [8, 64], strides = [1, 1]} : vector<8x256xf32> to vector<8x64xf32>
    %106 = vector.extract_strided_slice %103 {offsets = [0, 128], sizes = [8, 64], strides = [1, 1]} : vector<8x256xf32> to vector<8x64xf32>
    %107 = vector.extract_strided_slice %103 {offsets = [0, 192], sizes = [8, 64], strides = [1, 1]} : vector<8x256xf32> to vector<8x64xf32>
    %108 = arith.mulf %105, %64 : vector<8x64xf32>
    %109 = arith.mulf %104, %106 : vector<8x64xf32>
    %110 = arith.addf %108, %109 : vector<8x64xf32>
    %111 = math.tanh %110 : vector<8x64xf32>
    %112 = arith.mulf %107, %111 : vector<8x64xf32>
    %c1 = arith.constant 1 : index
    %c0_33 = arith.constant 0 : index
    %c0_34 = arith.constant 0 : index
    %113 = vector.load %arg13[%c1, %c0_33, %c0_34] : memref<8x8x512xf32, #tpu.memory_space<vmem>>, vector<1x8x512xf32>
    %114 = vector.shape_cast %113 : vector<1x8x512xf32> to vector<8x512xf32>
    %115 = arith.truncf %90 : vector<8x128xf32> to vector<8x128xbf16>
    %c0_35 = arith.constant 0 : index
    %c0_36 = arith.constant 0 : index
    %116 = vector.load %arg11[%c0_35, %c0_36] : memref<128x512xbf16, #tpu.memory_space<vmem>>, vector<128x512xbf16>
    %cst_37 = arith.constant dense<0.000000e+00> : vector<8x512xf32>
    %117 = tpu.matmul %115, %116, %cst_37 {dimension_numbers = #tpu.dot_dimension_numbers<[1], [0], [0], [1], [0, 0, 1, 1], [], []>} : vector<8x128xbf16>, vector<128x512xbf16>, vector<8x512xf32> -> vector<8x512xf32>
    %118 = arith.addf %114, %117 : vector<8x512xf32>
    %119 = arith.mulf %118, %50 : vector<8x512xf32>
    %120 = math.tanh %119 : vector<8x512xf32>
    %cst_38 = arith.constant 1.000000e+00 : f32
    %121 = vector.broadcast %cst_38 : f32 to vector<8x512xf32>
    %122 = arith.subf %120, %121 : vector<8x512xf32>
    %123 = arith.mulf %50, %122 : vector<8x512xf32>
    %cst_39 = arith.constant 1.000000e+00 : f32
    %124 = vector.broadcast %cst_39 : f32 to vector<8x512xf32>
    %125 = arith.addf %123, %124 : vector<8x512xf32>
    %126 = vector.extract_strided_slice %125 {offsets = [0, 0], sizes = [8, 128], strides = [1, 1]} : vector<8x512xf32> to vector<8x128xf32>
    %127 = vector.extract_strided_slice %125 {offsets = [0, 128], sizes = [8, 128], strides = [1, 1]} : vector<8x512xf32> to vector<8x128xf32>
    %128 = vector.extract_strided_slice %125 {offsets = [0, 256], sizes = [8, 128], strides = [1, 1]} : vector<8x512xf32> to vector<8x128xf32>
    %129 = vector.extract_strided_slice %125 {offsets = [0, 384], sizes = [8, 128], strides = [1, 1]} : vector<8x512xf32> to vector<8x128xf32>
    %130 = arith.mulf %127, %88 : vector<8x128xf32>
    %131 = arith.mulf %126, %128 : vector<8x128xf32>
    %132 = arith.addf %130, %131 : vector<8x128xf32>
    %133 = math.tanh %132 : vector<8x128xf32>
    %134 = arith.mulf %129, %133 : vector<8x128xf32>
    %135 = tpu.concatenate %134, %112 in 1 : vector<8x128xf32>, vector<8x64xf32> -> vector<8x192xf32>
    %136 = arith.truncf %135 : vector<8x192xf32> to vector<8x192xbf16>
    %c0_40 = arith.constant 0 : index
    %c0_41 = arith.constant 0 : index
    %137 = vector.load %arg12[%c0_40, %c0_41] : memref<192x256xbf16, #tpu.memory_space<vmem>>, vector<192x256xbf16>
    %cst_42 = arith.constant dense<0.000000e+00> : vector<8x256xf32>
    %138 = tpu.matmul %136, %137, %cst_42 {dimension_numbers = #tpu.dot_dimension_numbers<[1], [0], [0], [1], [0, 0, 1, 1], [], []>} : vector<8x192xbf16>, vector<192x256xbf16>, vector<8x256xf32> -> vector<8x256xf32>
    %139 = vector.broadcast %60 : vector<1x256xf32> to vector<8x256xf32>
    %140 = arith.addf %138, %139 : vector<8x256xf32>
    %141 = arith.mulf %140, %59 : vector<8x256xf32>
    %142 = math.tanh %141 : vector<8x256xf32>
    %cst_43 = arith.constant 1.000000e+00 : f32
    %143 = vector.broadcast %cst_43 : f32 to vector<8x256xf32>
    %144 = arith.subf %142, %143 : vector<8x256xf32>
    %145 = arith.mulf %59, %144 : vector<8x256xf32>
    %cst_44 = arith.constant 1.000000e+00 : f32
    %146 = vector.broadcast %cst_44 : f32 to vector<8x256xf32>
    %147 = arith.addf %145, %146 : vector<8x256xf32>
    %148 = vector.extract_strided_slice %147 {offsets = [0, 0], sizes = [8, 64], strides = [1, 1]} : vector<8x256xf32> to vector<8x64xf32>
    %149 = vector.extract_strided_slice %147 {offsets = [0, 64], sizes = [8, 64], strides = [1, 1]} : vector<8x256xf32> to vector<8x64xf32>
    %150 = vector.extract_strided_slice %147 {offsets = [0, 128], sizes = [8, 64], strides = [1, 1]} : vector<8x256xf32> to vector<8x64xf32>
    %151 = vector.extract_strided_slice %147 {offsets = [0, 192], sizes = [8, 64], strides = [1, 1]} : vector<8x256xf32> to vector<8x64xf32>
    %152 = arith.mulf %149, %110 : vector<8x64xf32>
    %153 = arith.mulf %148, %150 : vector<8x64xf32>
    %154 = arith.addf %152, %153 : vector<8x64xf32>
    %155 = math.tanh %154 : vector<8x64xf32>
    %156 = arith.mulf %151, %155 : vector<8x64xf32>
    %c2 = arith.constant 2 : index
    %c0_45 = arith.constant 0 : index
    %c0_46 = arith.constant 0 : index
    %157 = vector.load %arg13[%c2, %c0_45, %c0_46] : memref<8x8x512xf32, #tpu.memory_space<vmem>>, vector<1x8x512xf32>
    %158 = vector.shape_cast %157 : vector<1x8x512xf32> to vector<8x512xf32>
    %159 = arith.truncf %134 : vector<8x128xf32> to vector<8x128xbf16>
    %c0_47 = arith.constant 0 : index
    %c0_48 = arith.constant 0 : index
    %160 = vector.load %arg11[%c0_47, %c0_48] : memref<128x512xbf16, #tpu.memory_space<vmem>>, vector<128x512xbf16>
    %cst_49 = arith.constant dense<0.000000e+00> : vector<8x512xf32>
    %161 = tpu.matmul %159, %160, %cst_49 {dimension_numbers = #tpu.dot_dimension_numbers<[1], [0], [0], [1], [0, 0, 1, 1], [], []>} : vector<8x128xbf16>, vector<128x512xbf16>, vector<8x512xf32> -> vector<8x512xf32>
    %162 = arith.addf %158, %161 : vector<8x512xf32>
    %163 = arith.mulf %162, %50 : vector<8x512xf32>
    %164 = math.tanh %163 : vector<8x512xf32>
    %cst_50 = arith.constant 1.000000e+00 : f32
    %165 = vector.broadcast %cst_50 : f32 to vector<8x512xf32>
    %166 = arith.subf %164, %165 : vector<8x512xf32>
    %167 = arith.mulf %50, %166 : vector<8x512xf32>
    %cst_51 = arith.constant 1.000000e+00 : f32
    %168 = vector.broadcast %cst_51 : f32 to vector<8x512xf32>
    %169 = arith.addf %167, %168 : vector<8x512xf32>
    %170 = vector.extract_strided_slice %169 {offsets = [0, 0], sizes = [8, 128], strides = [1, 1]} : vector<8x512xf32> to vector<8x128xf32>
    %171 = vector.extract_strided_slice %169 {offsets = [0, 128], sizes = [8, 128], strides = [1, 1]} : vector<8x512xf32> to vector<8x128xf32>
    %172 = vector.extract_strided_slice %169 {offsets = [0, 256], sizes = [8, 128], strides = [1, 1]} : vector<8x512xf32> to vector<8x128xf32>
    %173 = vector.extract_strided_slice %169 {offsets = [0, 384], sizes = [8, 128], strides = [1, 1]} : vector<8x512xf32> to vector<8x128xf32>
    %174 = arith.mulf %171, %132 : vector<8x128xf32>
    %175 = arith.mulf %170, %172 : vector<8x128xf32>
    %176 = arith.addf %174, %175 : vector<8x128xf32>
    %177 = math.tanh %176 : vector<8x128xf32>
    %178 = arith.mulf %173, %177 : vector<8x128xf32>
    %179 = tpu.concatenate %178, %156 in 1 : vector<8x128xf32>, vector<8x64xf32> -> vector<8x192xf32>
    %180 = arith.truncf %179 : vector<8x192xf32> to vector<8x192xbf16>
    %c0_52 = arith.constant 0 : index
    %c0_53 = arith.constant 0 : index
    %181 = vector.load %arg12[%c0_52, %c0_53] : memref<192x256xbf16, #tpu.memory_space<vmem>>, vector<192x256xbf16>
    %cst_54 = arith.constant dense<0.000000e+00> : vector<8x256xf32>
    %182 = tpu.matmul %180, %181, %cst_54 {dimension_numbers = #tpu.dot_dimension_numbers<[1], [0], [0], [1], [0, 0, 1, 1], [], []>} : vector<8x192xbf16>, vector<192x256xbf16>, vector<8x256xf32> -> vector<8x256xf32>
    %183 = vector.broadcast %60 : vector<1x256xf32> to vector<8x256xf32>
    %184 = arith.addf %182, %183 : vector<8x256xf32>
    %185 = arith.mulf %184, %59 : vector<8x256xf32>
    %186 = math.tanh %185 : vector<8x256xf32>
    %cst_55 = arith.constant 1.000000e+00 : f32
    %187 = vector.broadcast %cst_55 : f32 to vector<8x256xf32>
    %188 = arith.subf %186, %187 : vector<8x256xf32>
    %189 = arith.mulf %59, %188 : vector<8x256xf32>
    %cst_56 = arith.constant 1.000000e+00 : f32
    %190 = vector.broadcast %cst_56 : f32 to vector<8x256xf32>
    %191 = arith.addf %189, %190 : vector<8x256xf32>
    %192 = vector.extract_strided_slice %191 {offsets = [0, 0], sizes = [8, 64], strides = [1, 1]} : vector<8x256xf32> to vector<8x64xf32>
    %193 = vector.extract_strided_slice %191 {offsets = [0, 64], sizes = [8, 64], strides = [1, 1]} : vector<8x256xf32> to vector<8x64xf32>
    %194 = vector.extract_strided_slice %191 {offsets = [0, 128], sizes = [8, 64], strides = [1, 1]} : vector<8x256xf32> to vector<8x64xf32>
    %195 = vector.extract_strided_slice %191 {offsets = [0, 192], sizes = [8, 64], strides = [1, 1]} : vector<8x256xf32> to vector<8x64xf32>
    %196 = arith.mulf %193, %154 : vector<8x64xf32>
    %197 = arith.mulf %192, %194 : vector<8x64xf32>
    %198 = arith.addf %196, %197 : vector<8x64xf32>
    %199 = math.tanh %198 : vector<8x64xf32>
    %200 = arith.mulf %195, %199 : vector<8x64xf32>
    %c3 = arith.constant 3 : index
    %c0_57 = arith.constant 0 : index
    %c0_58 = arith.constant 0 : index
    %201 = vector.load %arg13[%c3, %c0_57, %c0_58] : memref<8x8x512xf32, #tpu.memory_space<vmem>>, vector<1x8x512xf32>
    %202 = vector.shape_cast %201 : vector<1x8x512xf32> to vector<8x512xf32>
    %203 = arith.truncf %178 : vector<8x128xf32> to vector<8x128xbf16>
    %c0_59 = arith.constant 0 : index
    %c0_60 = arith.constant 0 : index
    %204 = vector.load %arg11[%c0_59, %c0_60] : memref<128x512xbf16, #tpu.memory_space<vmem>>, vector<128x512xbf16>
    %cst_61 = arith.constant dense<0.000000e+00> : vector<8x512xf32>
    %205 = tpu.matmul %203, %204, %cst_61 {dimension_numbers = #tpu.dot_dimension_numbers<[1], [0], [0], [1], [0, 0, 1, 1], [], []>} : vector<8x128xbf16>, vector<128x512xbf16>, vector<8x512xf32> -> vector<8x512xf32>
    %206 = arith.addf %202, %205 : vector<8x512xf32>
    %207 = arith.mulf %206, %50 : vector<8x512xf32>
    %208 = math.tanh %207 : vector<8x512xf32>
    %cst_62 = arith.constant 1.000000e+00 : f32
    %209 = vector.broadcast %cst_62 : f32 to vector<8x512xf32>
    %210 = arith.subf %208, %209 : vector<8x512xf32>
    %211 = arith.mulf %50, %210 : vector<8x512xf32>
    %cst_63 = arith.constant 1.000000e+00 : f32
    %212 = vector.broadcast %cst_63 : f32 to vector<8x512xf32>
    %213 = arith.addf %211, %212 : vector<8x512xf32>
    %214 = vector.extract_strided_slice %213 {offsets = [0, 0], sizes = [8, 128], strides = [1, 1]} : vector<8x512xf32> to vector<8x128xf32>
    %215 = vector.extract_strided_slice %213 {offsets = [0, 128], sizes = [8, 128], strides = [1, 1]} : vector<8x512xf32> to vector<8x128xf32>
    %216 = vector.extract_strided_slice %213 {offsets = [0, 256], sizes = [8, 128], strides = [1, 1]} : vector<8x512xf32> to vector<8x128xf32>
    %217 = vector.extract_strided_slice %213 {offsets = [0, 384], sizes = [8, 128], strides = [1, 1]} : vector<8x512xf32> to vector<8x128xf32>
    %218 = arith.mulf %215, %176 : vector<8x128xf32>
    %219 = arith.mulf %214, %216 : vector<8x128xf32>
    %220 = arith.addf %218, %219 : vector<8x128xf32>
    %221 = math.tanh %220 : vector<8x128xf32>
    %222 = arith.mulf %217, %221 : vector<8x128xf32>
    %223 = tpu.concatenate %222, %200 in 1 : vector<8x128xf32>, vector<8x64xf32> -> vector<8x192xf32>
    %224 = arith.truncf %223 : vector<8x192xf32> to vector<8x192xbf16>
    %c0_64 = arith.constant 0 : index
    %c0_65 = arith.constant 0 : index
    %225 = vector.load %arg12[%c0_64, %c0_65] : memref<192x256xbf16, #tpu.memory_space<vmem>>, vector<192x256xbf16>
    %cst_66 = arith.constant dense<0.000000e+00> : vector<8x256xf32>
    %226 = tpu.matmul %224, %225, %cst_66 {dimension_numbers = #tpu.dot_dimension_numbers<[1], [0], [0], [1], [0, 0, 1, 1], [], []>} : vector<8x192xbf16>, vector<192x256xbf16>, vector<8x256xf32> -> vector<8x256xf32>
    %227 = vector.broadcast %60 : vector<1x256xf32> to vector<8x256xf32>
    %228 = arith.addf %226, %227 : vector<8x256xf32>
    %229 = arith.mulf %228, %59 : vector<8x256xf32>
    %230 = math.tanh %229 : vector<8x256xf32>
    %cst_67 = arith.constant 1.000000e+00 : f32
    %231 = vector.broadcast %cst_67 : f32 to vector<8x256xf32>
    %232 = arith.subf %230, %231 : vector<8x256xf32>
    %233 = arith.mulf %59, %232 : vector<8x256xf32>
    %cst_68 = arith.constant 1.000000e+00 : f32
    %234 = vector.broadcast %cst_68 : f32 to vector<8x256xf32>
    %235 = arith.addf %233, %234 : vector<8x256xf32>
    %236 = vector.extract_strided_slice %235 {offsets = [0, 0], sizes = [8, 64], strides = [1, 1]} : vector<8x256xf32> to vector<8x64xf32>
    %237 = vector.extract_strided_slice %235 {offsets = [0, 64], sizes = [8, 64], strides = [1, 1]} : vector<8x256xf32> to vector<8x64xf32>
    %238 = vector.extract_strided_slice %235 {offsets = [0, 128], sizes = [8, 64], strides = [1, 1]} : vector<8x256xf32> to vector<8x64xf32>
    %239 = vector.extract_strided_slice %235 {offsets = [0, 192], sizes = [8, 64], strides = [1, 1]} : vector<8x256xf32> to vector<8x64xf32>
    %240 = arith.mulf %237, %198 : vector<8x64xf32>
    %241 = arith.mulf %236, %238 : vector<8x64xf32>
    %242 = arith.addf %240, %241 : vector<8x64xf32>
    %243 = math.tanh %242 : vector<8x64xf32>
    %244 = arith.mulf %239, %243 : vector<8x64xf32>
    %c4 = arith.constant 4 : index
    %c0_69 = arith.constant 0 : index
    %c0_70 = arith.constant 0 : index
    %245 = vector.load %arg13[%c4, %c0_69, %c0_70] : memref<8x8x512xf32, #tpu.memory_space<vmem>>, vector<1x8x512xf32>
    %246 = vector.shape_cast %245 : vector<1x8x512xf32> to vector<8x512xf32>
    %247 = arith.truncf %222 : vector<8x128xf32> to vector<8x128xbf16>
    %c0_71 = arith.constant 0 : index
    %c0_72 = arith.constant 0 : index
    %248 = vector.load %arg11[%c0_71, %c0_72] : memref<128x512xbf16, #tpu.memory_space<vmem>>, vector<128x512xbf16>
    %cst_73 = arith.constant dense<0.000000e+00> : vector<8x512xf32>
    %249 = tpu.matmul %247, %248, %cst_73 {dimension_numbers = #tpu.dot_dimension_numbers<[1], [0], [0], [1], [0, 0, 1, 1], [], []>} : vector<8x128xbf16>, vector<128x512xbf16>, vector<8x512xf32> -> vector<8x512xf32>
    %250 = arith.addf %246, %249 : vector<8x512xf32>
    %251 = arith.mulf %250, %50 : vector<8x512xf32>
    %252 = math.tanh %251 : vector<8x512xf32>
    %cst_74 = arith.constant 1.000000e+00 : f32
    %253 = vector.broadcast %cst_74 : f32 to vector<8x512xf32>
    %254 = arith.subf %252, %253 : vector<8x512xf32>
    %255 = arith.mulf %50, %254 : vector<8x512xf32>
    %cst_75 = arith.constant 1.000000e+00 : f32
    %256 = vector.broadcast %cst_75 : f32 to vector<8x512xf32>
    %257 = arith.addf %255, %256 : vector<8x512xf32>
    %258 = vector.extract_strided_slice %257 {offsets = [0, 0], sizes = [8, 128], strides = [1, 1]} : vector<8x512xf32> to vector<8x128xf32>
    %259 = vector.extract_strided_slice %257 {offsets = [0, 128], sizes = [8, 128], strides = [1, 1]} : vector<8x512xf32> to vector<8x128xf32>
    %260 = vector.extract_strided_slice %257 {offsets = [0, 256], sizes = [8, 128], strides = [1, 1]} : vector<8x512xf32> to vector<8x128xf32>
    %261 = vector.extract_strided_slice %257 {offsets = [0, 384], sizes = [8, 128], strides = [1, 1]} : vector<8x512xf32> to vector<8x128xf32>
    %262 = arith.mulf %259, %220 : vector<8x128xf32>
    %263 = arith.mulf %258, %260 : vector<8x128xf32>
    %264 = arith.addf %262, %263 : vector<8x128xf32>
    %265 = math.tanh %264 : vector<8x128xf32>
    %266 = arith.mulf %261, %265 : vector<8x128xf32>
    %267 = tpu.concatenate %266, %244 in 1 : vector<8x128xf32>, vector<8x64xf32> -> vector<8x192xf32>
    %268 = arith.truncf %267 : vector<8x192xf32> to vector<8x192xbf16>
    %c0_76 = arith.constant 0 : index
    %c0_77 = arith.constant 0 : index
    %269 = vector.load %arg12[%c0_76, %c0_77] : memref<192x256xbf16, #tpu.memory_space<vmem>>, vector<192x256xbf16>
    %cst_78 = arith.constant dense<0.000000e+00> : vector<8x256xf32>
    %270 = tpu.matmul %268, %269, %cst_78 {dimension_numbers = #tpu.dot_dimension_numbers<[1], [0], [0], [1], [0, 0, 1, 1], [], []>} : vector<8x192xbf16>, vector<192x256xbf16>, vector<8x256xf32> -> vector<8x256xf32>
    %271 = vector.broadcast %60 : vector<1x256xf32> to vector<8x256xf32>
    %272 = arith.addf %270, %271 : vector<8x256xf32>
    %273 = arith.mulf %272, %59 : vector<8x256xf32>
    %274 = math.tanh %273 : vector<8x256xf32>
    %cst_79 = arith.constant 1.000000e+00 : f32
    %275 = vector.broadcast %cst_79 : f32 to vector<8x256xf32>
    %276 = arith.subf %274, %275 : vector<8x256xf32>
    %277 = arith.mulf %59, %276 : vector<8x256xf32>
    %cst_80 = arith.constant 1.000000e+00 : f32
    %278 = vector.broadcast %cst_80 : f32 to vector<8x256xf32>
    %279 = arith.addf %277, %278 : vector<8x256xf32>
    %280 = vector.extract_strided_slice %279 {offsets = [0, 0], sizes = [8, 64], strides = [1, 1]} : vector<8x256xf32> to vector<8x64xf32>
    %281 = vector.extract_strided_slice %279 {offsets = [0, 64], sizes = [8, 64], strides = [1, 1]} : vector<8x256xf32> to vector<8x64xf32>
    %282 = vector.extract_strided_slice %279 {offsets = [0, 128], sizes = [8, 64], strides = [1, 1]} : vector<8x256xf32> to vector<8x64xf32>
    %283 = vector.extract_strided_slice %279 {offsets = [0, 192], sizes = [8, 64], strides = [1, 1]} : vector<8x256xf32> to vector<8x64xf32>
    %284 = arith.mulf %281, %242 : vector<8x64xf32>
    %285 = arith.mulf %280, %282 : vector<8x64xf32>
    %286 = arith.addf %284, %285 : vector<8x64xf32>
    %287 = math.tanh %286 : vector<8x64xf32>
    %288 = arith.mulf %283, %287 : vector<8x64xf32>
    %c5 = arith.constant 5 : index
    %c0_81 = arith.constant 0 : index
    %c0_82 = arith.constant 0 : index
    %289 = vector.load %arg13[%c5, %c0_81, %c0_82] : memref<8x8x512xf32, #tpu.memory_space<vmem>>, vector<1x8x512xf32>
    %290 = vector.shape_cast %289 : vector<1x8x512xf32> to vector<8x512xf32>
    %291 = arith.truncf %266 : vector<8x128xf32> to vector<8x128xbf16>
    %c0_83 = arith.constant 0 : index
    %c0_84 = arith.constant 0 : index
    %292 = vector.load %arg11[%c0_83, %c0_84] : memref<128x512xbf16, #tpu.memory_space<vmem>>, vector<128x512xbf16>
    %cst_85 = arith.constant dense<0.000000e+00> : vector<8x512xf32>
    %293 = tpu.matmul %291, %292, %cst_85 {dimension_numbers = #tpu.dot_dimension_numbers<[1], [0], [0], [1], [0, 0, 1, 1], [], []>} : vector<8x128xbf16>, vector<128x512xbf16>, vector<8x512xf32> -> vector<8x512xf32>
    %294 = arith.addf %290, %293 : vector<8x512xf32>
    %295 = arith.mulf %294, %50 : vector<8x512xf32>
    %296 = math.tanh %295 : vector<8x512xf32>
    %cst_86 = arith.constant 1.000000e+00 : f32
    %297 = vector.broadcast %cst_86 : f32 to vector<8x512xf32>
    %298 = arith.subf %296, %297 : vector<8x512xf32>
    %299 = arith.mulf %50, %298 : vector<8x512xf32>
    %cst_87 = arith.constant 1.000000e+00 : f32
    %300 = vector.broadcast %cst_87 : f32 to vector<8x512xf32>
    %301 = arith.addf %299, %300 : vector<8x512xf32>
    %302 = vector.extract_strided_slice %301 {offsets = [0, 0], sizes = [8, 128], strides = [1, 1]} : vector<8x512xf32> to vector<8x128xf32>
    %303 = vector.extract_strided_slice %301 {offsets = [0, 128], sizes = [8, 128], strides = [1, 1]} : vector<8x512xf32> to vector<8x128xf32>
    %304 = vector.extract_strided_slice %301 {offsets = [0, 256], sizes = [8, 128], strides = [1, 1]} : vector<8x512xf32> to vector<8x128xf32>
    %305 = vector.extract_strided_slice %301 {offsets = [0, 384], sizes = [8, 128], strides = [1, 1]} : vector<8x512xf32> to vector<8x128xf32>
    %306 = arith.mulf %303, %264 : vector<8x128xf32>
    %307 = arith.mulf %302, %304 : vector<8x128xf32>
    %308 = arith.addf %306, %307 : vector<8x128xf32>
    %309 = math.tanh %308 : vector<8x128xf32>
    %310 = arith.mulf %305, %309 : vector<8x128xf32>
    %311 = tpu.concatenate %310, %288 in 1 : vector<8x128xf32>, vector<8x64xf32> -> vector<8x192xf32>
    %312 = arith.truncf %311 : vector<8x192xf32> to vector<8x192xbf16>
    %c0_88 = arith.constant 0 : index
    %c0_89 = arith.constant 0 : index
    %313 = vector.load %arg12[%c0_88, %c0_89] : memref<192x256xbf16, #tpu.memory_space<vmem>>, vector<192x256xbf16>
    %cst_90 = arith.constant dense<0.000000e+00> : vector<8x256xf32>
    %314 = tpu.matmul %312, %313, %cst_90 {dimension_numbers = #tpu.dot_dimension_numbers<[1], [0], [0], [1], [0, 0, 1, 1], [], []>} : vector<8x192xbf16>, vector<192x256xbf16>, vector<8x256xf32> -> vector<8x256xf32>
    %315 = vector.broadcast %60 : vector<1x256xf32> to vector<8x256xf32>
    %316 = arith.addf %314, %315 : vector<8x256xf32>
    %317 = arith.mulf %316, %59 : vector<8x256xf32>
    %318 = math.tanh %317 : vector<8x256xf32>
    %cst_91 = arith.constant 1.000000e+00 : f32
    %319 = vector.broadcast %cst_91 : f32 to vector<8x256xf32>
    %320 = arith.subf %318, %319 : vector<8x256xf32>
    %321 = arith.mulf %59, %320 : vector<8x256xf32>
    %cst_92 = arith.constant 1.000000e+00 : f32
    %322 = vector.broadcast %cst_92 : f32 to vector<8x256xf32>
    %323 = arith.addf %321, %322 : vector<8x256xf32>
    %324 = vector.extract_strided_slice %323 {offsets = [0, 0], sizes = [8, 64], strides = [1, 1]} : vector<8x256xf32> to vector<8x64xf32>
    %325 = vector.extract_strided_slice %323 {offsets = [0, 64], sizes = [8, 64], strides = [1, 1]} : vector<8x256xf32> to vector<8x64xf32>
    %326 = vector.extract_strided_slice %323 {offsets = [0, 128], sizes = [8, 64], strides = [1, 1]} : vector<8x256xf32> to vector<8x64xf32>
    %327 = vector.extract_strided_slice %323 {offsets = [0, 192], sizes = [8, 64], strides = [1, 1]} : vector<8x256xf32> to vector<8x64xf32>
    %328 = arith.mulf %325, %286 : vector<8x64xf32>
    %329 = arith.mulf %324, %326 : vector<8x64xf32>
    %330 = arith.addf %328, %329 : vector<8x64xf32>
    %331 = math.tanh %330 : vector<8x64xf32>
    %332 = arith.mulf %327, %331 : vector<8x64xf32>
    %c6 = arith.constant 6 : index
    %c0_93 = arith.constant 0 : index
    %c0_94 = arith.constant 0 : index
    %333 = vector.load %arg13[%c6, %c0_93, %c0_94] : memref<8x8x512xf32, #tpu.memory_space<vmem>>, vector<1x8x512xf32>
    %334 = vector.shape_cast %333 : vector<1x8x512xf32> to vector<8x512xf32>
    %335 = arith.truncf %310 : vector<8x128xf32> to vector<8x128xbf16>
    %c0_95 = arith.constant 0 : index
    %c0_96 = arith.constant 0 : index
    %336 = vector.load %arg11[%c0_95, %c0_96] : memref<128x512xbf16, #tpu.memory_space<vmem>>, vector<128x512xbf16>
    %cst_97 = arith.constant dense<0.000000e+00> : vector<8x512xf32>
    %337 = tpu.matmul %335, %336, %cst_97 {dimension_numbers = #tpu.dot_dimension_numbers<[1], [0], [0], [1], [0, 0, 1, 1], [], []>} : vector<8x128xbf16>, vector<128x512xbf16>, vector<8x512xf32> -> vector<8x512xf32>
    %338 = arith.addf %334, %337 : vector<8x512xf32>
    %339 = arith.mulf %338, %50 : vector<8x512xf32>
    %340 = math.tanh %339 : vector<8x512xf32>
    %cst_98 = arith.constant 1.000000e+00 : f32
    %341 = vector.broadcast %cst_98 : f32 to vector<8x512xf32>
    %342 = arith.subf %340, %341 : vector<8x512xf32>
    %343 = arith.mulf %50, %342 : vector<8x512xf32>
    %cst_99 = arith.constant 1.000000e+00 : f32
    %344 = vector.broadcast %cst_99 : f32 to vector<8x512xf32>
    %345 = arith.addf %343, %344 : vector<8x512xf32>
    %346 = vector.extract_strided_slice %345 {offsets = [0, 0], sizes = [8, 128], strides = [1, 1]} : vector<8x512xf32> to vector<8x128xf32>
    %347 = vector.extract_strided_slice %345 {offsets = [0, 128], sizes = [8, 128], strides = [1, 1]} : vector<8x512xf32> to vector<8x128xf32>
    %348 = vector.extract_strided_slice %345 {offsets = [0, 256], sizes = [8, 128], strides = [1, 1]} : vector<8x512xf32> to vector<8x128xf32>
    %349 = vector.extract_strided_slice %345 {offsets = [0, 384], sizes = [8, 128], strides = [1, 1]} : vector<8x512xf32> to vector<8x128xf32>
    %350 = arith.mulf %347, %308 : vector<8x128xf32>
    %351 = arith.mulf %346, %348 : vector<8x128xf32>
    %352 = arith.addf %350, %351 : vector<8x128xf32>
    %353 = math.tanh %352 : vector<8x128xf32>
    %354 = arith.mulf %349, %353 : vector<8x128xf32>
    %355 = tpu.concatenate %354, %332 in 1 : vector<8x128xf32>, vector<8x64xf32> -> vector<8x192xf32>
    %356 = arith.truncf %355 : vector<8x192xf32> to vector<8x192xbf16>
    %c0_100 = arith.constant 0 : index
    %c0_101 = arith.constant 0 : index
    %357 = vector.load %arg12[%c0_100, %c0_101] : memref<192x256xbf16, #tpu.memory_space<vmem>>, vector<192x256xbf16>
    %cst_102 = arith.constant dense<0.000000e+00> : vector<8x256xf32>
    %358 = tpu.matmul %356, %357, %cst_102 {dimension_numbers = #tpu.dot_dimension_numbers<[1], [0], [0], [1], [0, 0, 1, 1], [], []>} : vector<8x192xbf16>, vector<192x256xbf16>, vector<8x256xf32> -> vector<8x256xf32>
    %359 = vector.broadcast %60 : vector<1x256xf32> to vector<8x256xf32>
    %360 = arith.addf %358, %359 : vector<8x256xf32>
    %361 = arith.mulf %360, %59 : vector<8x256xf32>
    %362 = math.tanh %361 : vector<8x256xf32>
    %cst_103 = arith.constant 1.000000e+00 : f32
    %363 = vector.broadcast %cst_103 : f32 to vector<8x256xf32>
    %364 = arith.subf %362, %363 : vector<8x256xf32>
    %365 = arith.mulf %59, %364 : vector<8x256xf32>
    %cst_104 = arith.constant 1.000000e+00 : f32
    %366 = vector.broadcast %cst_104 : f32 to vector<8x256xf32>
    %367 = arith.addf %365, %366 : vector<8x256xf32>
    %368 = vector.extract_strided_slice %367 {offsets = [0, 0], sizes = [8, 64], strides = [1, 1]} : vector<8x256xf32> to vector<8x64xf32>
    %369 = vector.extract_strided_slice %367 {offsets = [0, 64], sizes = [8, 64], strides = [1, 1]} : vector<8x256xf32> to vector<8x64xf32>
    %370 = vector.extract_strided_slice %367 {offsets = [0, 128], sizes = [8, 64], strides = [1, 1]} : vector<8x256xf32> to vector<8x64xf32>
    %371 = vector.extract_strided_slice %367 {offsets = [0, 192], sizes = [8, 64], strides = [1, 1]} : vector<8x256xf32> to vector<8x64xf32>
    %372 = arith.mulf %369, %330 : vector<8x64xf32>
    %373 = arith.mulf %368, %370 : vector<8x64xf32>
    %374 = arith.addf %372, %373 : vector<8x64xf32>
    %375 = math.tanh %374 : vector<8x64xf32>
    %376 = arith.mulf %371, %375 : vector<8x64xf32>
    %c7 = arith.constant 7 : index
    %c0_105 = arith.constant 0 : index
    %c0_106 = arith.constant 0 : index
    %377 = vector.load %arg13[%c7, %c0_105, %c0_106] : memref<8x8x512xf32, #tpu.memory_space<vmem>>, vector<1x8x512xf32>
    %378 = vector.shape_cast %377 : vector<1x8x512xf32> to vector<8x512xf32>
    %379 = arith.truncf %354 : vector<8x128xf32> to vector<8x128xbf16>
    %c0_107 = arith.constant 0 : index
    %c0_108 = arith.constant 0 : index
    %380 = vector.load %arg11[%c0_107, %c0_108] : memref<128x512xbf16, #tpu.memory_space<vmem>>, vector<128x512xbf16>
    %cst_109 = arith.constant dense<0.000000e+00> : vector<8x512xf32>
    %381 = tpu.matmul %379, %380, %cst_109 {dimension_numbers = #tpu.dot_dimension_numbers<[1], [0], [0], [1], [0, 0, 1, 1], [], []>} : vector<8x128xbf16>, vector<128x512xbf16>, vector<8x512xf32> -> vector<8x512xf32>
    %382 = arith.addf %378, %381 : vector<8x512xf32>
    %383 = arith.mulf %382, %50 : vector<8x512xf32>
    %384 = math.tanh %383 : vector<8x512xf32>
    %cst_110 = arith.constant 1.000000e+00 : f32
    %385 = vector.broadcast %cst_110 : f32 to vector<8x512xf32>
    %386 = arith.subf %384, %385 : vector<8x512xf32>
    %387 = arith.mulf %50, %386 : vector<8x512xf32>
    %cst_111 = arith.constant 1.000000e+00 : f32
    %388 = vector.broadcast %cst_111 : f32 to vector<8x512xf32>
    %389 = arith.addf %387, %388 : vector<8x512xf32>
    %390 = vector.extract_strided_slice %389 {offsets = [0, 0], sizes = [8, 128], strides = [1, 1]} : vector<8x512xf32> to vector<8x128xf32>
    %391 = vector.extract_strided_slice %389 {offsets = [0, 128], sizes = [8, 128], strides = [1, 1]} : vector<8x512xf32> to vector<8x128xf32>
    %392 = vector.extract_strided_slice %389 {offsets = [0, 256], sizes = [8, 128], strides = [1, 1]} : vector<8x512xf32> to vector<8x128xf32>
    %393 = vector.extract_strided_slice %389 {offsets = [0, 384], sizes = [8, 128], strides = [1, 1]} : vector<8x512xf32> to vector<8x128xf32>
    %394 = arith.mulf %391, %352 : vector<8x128xf32>
    %395 = arith.mulf %390, %392 : vector<8x128xf32>
    %396 = arith.addf %394, %395 : vector<8x128xf32>
    %397 = math.tanh %396 : vector<8x128xf32>
    %398 = arith.mulf %393, %397 : vector<8x128xf32>
    %399 = tpu.concatenate %398, %376 in 1 : vector<8x128xf32>, vector<8x64xf32> -> vector<8x192xf32>
    %400 = arith.truncf %399 : vector<8x192xf32> to vector<8x192xbf16>
    %c0_112 = arith.constant 0 : index
    %c0_113 = arith.constant 0 : index
    %401 = vector.load %arg12[%c0_112, %c0_113] : memref<192x256xbf16, #tpu.memory_space<vmem>>, vector<192x256xbf16>
    %cst_114 = arith.constant dense<0.000000e+00> : vector<8x256xf32>
    %402 = tpu.matmul %400, %401, %cst_114 {dimension_numbers = #tpu.dot_dimension_numbers<[1], [0], [0], [1], [0, 0, 1, 1], [], []>} : vector<8x192xbf16>, vector<192x256xbf16>, vector<8x256xf32> -> vector<8x256xf32>
    %403 = vector.broadcast %60 : vector<1x256xf32> to vector<8x256xf32>
    %404 = arith.addf %402, %403 : vector<8x256xf32>
    %405 = arith.mulf %404, %59 : vector<8x256xf32>
    %406 = math.tanh %405 : vector<8x256xf32>
    %cst_115 = arith.constant 1.000000e+00 : f32
    %407 = vector.broadcast %cst_115 : f32 to vector<8x256xf32>
    %408 = arith.subf %406, %407 : vector<8x256xf32>
    %409 = arith.mulf %59, %408 : vector<8x256xf32>
    %cst_116 = arith.constant 1.000000e+00 : f32
    %410 = vector.broadcast %cst_116 : f32 to vector<8x256xf32>
    %411 = arith.addf %409, %410 : vector<8x256xf32>
    %412 = vector.extract_strided_slice %411 {offsets = [0, 0], sizes = [8, 64], strides = [1, 1]} : vector<8x256xf32> to vector<8x64xf32>
    %413 = vector.extract_strided_slice %411 {offsets = [0, 64], sizes = [8, 64], strides = [1, 1]} : vector<8x256xf32> to vector<8x64xf32>
    %414 = vector.extract_strided_slice %411 {offsets = [0, 128], sizes = [8, 64], strides = [1, 1]} : vector<8x256xf32> to vector<8x64xf32>
    %415 = vector.extract_strided_slice %411 {offsets = [0, 192], sizes = [8, 64], strides = [1, 1]} : vector<8x256xf32> to vector<8x64xf32>
    %416 = arith.mulf %413, %374 : vector<8x64xf32>
    %417 = arith.mulf %412, %414 : vector<8x64xf32>
    %418 = arith.addf %416, %417 : vector<8x64xf32>
    %419 = math.tanh %418 : vector<8x64xf32>
    %420 = arith.mulf %415, %419 : vector<8x64xf32>
    %c0_117 = arith.constant 0 : index
    %c0_118 = arith.constant 0 : index
    %421 = vector.load %arg6[%c0_117, %c0_118] : memref<64x32xf32, #tpu.memory_space<vmem>>, vector<64x32xf32>
    %cst_119 = arith.constant dense<0.000000e+00> : vector<8x32xf32>
    %422 = tpu.matmul %420, %421, %cst_119 {dimension_numbers = #tpu.dot_dimension_numbers<[1], [0], [0], [1], [0, 0, 1, 1], [], []>} : vector<8x64xf32>, vector<64x32xf32>, vector<8x32xf32> -> vector<8x32xf32>
    %c0_120 = arith.constant 0 : index
    %c0_121 = arith.constant 0 : index
    %423 = vector.load %arg7[%c0_120, %c0_121] : memref<1x32xf32, #tpu.memory_space<vmem>>, vector<1x32xf32>
    %424 = vector.broadcast %423 : vector<1x32xf32> to vector<8x32xf32>
    %425 = arith.addf %422, %424 : vector<8x32xf32>
    %cst_122 = arith.constant 0.000000e+00 : f32
    %426 = vector.broadcast %cst_122 : f32 to vector<8x32xf32>
    %427 = arith.maximumf %425, %426 : vector<8x32xf32>
    %c0_123 = arith.constant 0 : index
    %c0_124 = arith.constant 0 : index
    %428 = vector.load %arg8[%c0_123, %c0_124] : memref<32x5xf32, #tpu.memory_space<vmem>>, vector<32x5xf32>
    %cst_125 = arith.constant dense<0.000000e+00> : vector<8x5xf32>
    %429 = tpu.matmul %427, %428, %cst_125 {dimension_numbers = #tpu.dot_dimension_numbers<[1], [0], [0], [1], [0, 0, 1, 1], [], []>} : vector<8x32xf32>, vector<32x5xf32>, vector<8x5xf32> -> vector<8x5xf32>
    %c0_126 = arith.constant 0 : index
    %c0_127 = arith.constant 0 : index
    %430 = vector.load %arg9[%c0_126, %c0_127] : memref<1x5xf32, #tpu.memory_space<vmem>>, vector<1x5xf32>
    %431 = vector.broadcast %430 : vector<1x5xf32> to vector<8x5xf32>
    %432 = arith.addf %429, %431 : vector<8x5xf32>
    %433 = vector.extract_strided_slice %432 {offsets = [0, 0], sizes = [2, 5], strides = [1, 1]} : vector<8x5xf32> to vector<2x5xf32>
    %c0_128 = arith.constant 0 : index
    %c0_129 = arith.constant 0 : index
    %434 = vector.load %arg10[%c0_128, %c0_129] : memref<2x5xf32, #tpu.memory_space<vmem>>, vector<2x5xf32>
    tpu.vector_store %arg10[%c0_128, %c0_129], %433 {strides = array<i32>} : memref<2x5xf32, #tpu.memory_space<vmem>>, vector<2x5xf32>,
    return
  }
}

</mosaic_0001>

<llo_original>
// kernel: lstm_baseline_forward.1
$region0: #{lstm_baseline_forward.1}
  #allocation0 [shape = 'u32[]', space=smem, size = 0x4, offset = 0x4, fixed_abs, tag = 'smem constant byte address 0x4 - core index']
  #allocation1 [shape = 'u32[72,128]{1,0:T(1,128)}', space=vmem, size = 0x9000, scoped, tag = 'internal scratch']
  #allocation2 [shape = 'bf16[128,512]{1,0:T(8,128)(2,1)}', space=vmem, size = 0x20000, scoped, tag = 'scratch operand']
  #allocation3 [shape = 'bf16[192,256]{1,0:T(8,128)(2,1)}', space=vmem, size = 0x18000, scoped, tag = 'scratch operand']
  #allocation4 [shape = 'f32[8,8,512]{2,1,0:T(8,128)}', space=vmem, size = 0x20000, scoped, tag = 'scratch operand']
  #allocation5 [shape = 's32[2]{0}', space=sflag, size = 0x8, scoped, tag = 'scratch operand']
  #allocation8 [shape = 's32[]', space=sflag, size = 0x4, offset = 0, fixed_abs, tag = 'sflag constant byte address 0x0 - dummy sync flag']
  #allocation9 [shape = 's32[]', space=sflag, size = 0x4, offset = 0, fixed_abs, tag = 'sflag constant byte address 0x0 - dummy sync flag']
  #allocation10 [shape = 'u32[]', space=smem, size = 0x4, offset = 0x44, fixed_abs, tag = 'smem constant byte address 0x44 - assertion arg 0']
  #allocation11 [shape = 'u32[]', space=smem, size = 0x4, offset = 0x48, fixed_abs, tag = 'smem constant byte address 0x48 - assertion arg 1']
  #allocation12 [shape = 's32[]', space=sflag, size = 0x4, offset = 0, fixed_abs, tag = 'sflag constant byte address 0x0 - dummy sync flag']
  #allocation13 [shape = 's32[]', space=sflag, size = 0x4, offset = 0, fixed_abs, tag = 'sflag constant byte address 0x0 - dummy sync flag']
  %s0 = inlined_call_operand.vmem [shape: f32[8,8,4], index: 0, kind: input, shape index: {}]
  %s1 = inlined_call_operand.vmem [shape: f32[4,512], index: 1, kind: input, shape index: {}]
  %s2 = inlined_call_operand.vmem [shape: f32[1,512], index: 2, kind: input, shape index: {}]
  %s3 = inlined_call_operand.hbm [shape: bf16[128,512], index: 3, kind: input, shape index: {}]
  %s4 = inlined_call_operand.hbm [shape: bf16[192,256], index: 4, kind: input, shape index: {}]
  %s5 = inlined_call_operand.vmem [shape: f32[1,256], index: 5, kind: input, shape index: {}]
  %s6 = inlined_call_operand.vmem [shape: f32[64,32], index: 6, kind: input, shape index: {}]
  %s7 = inlined_call_operand.vmem [shape: f32[1,32], index: 7, kind: input, shape index: {}]
  %s8 = inlined_call_operand.vmem [shape: f32[32,5], index: 8, kind: input, shape index: {}]
  %s9 = inlined_call_operand.vmem [shape: f32[1,5], index: 9, kind: input, shape index: {}]
  %s10 = inlined_call_operand.hbm [shape: f32[2,5], index: 10, kind: output, shape index: {}]
  %s11 = sld [smem:[#allocation0]]
  $region50: #{lstm_baseline_forward.1} parent=0
    _
  %s13 = ssub.s32 1, %s11
  %s14 = scalar_select 0, %s13, %s11
  $region1: #{lstm_baseline_forward.1} parent=0
    #allocation6 [shape = 'u8[1024]{0}', space=vmem, size = 0x400, scoped, tag = 'output window, operand 0, single buffered']
    #allocation7 [shape = 's32[1]{0}', space=sflag, size = 0x4, scoped, tag = 'scoped memory for lstm_baseline_forward.1']
    %15 = vsyncpa [#allocation7], 0
    // Predicated region
    $region2: #{lstm_baseline_forward.1} parent=1 // pred_check
      _
    $region3: #{lstm_baseline_forward.1} parent=1 // pred_check_branch
      %17 = sbr.rel (0) target = $region5
    $region4: #{lstm_baseline_forward.1} parent=1 // pred_region
      _
    $region5: #{lstm_baseline_forward.1} parent=1 // pred_fallthru
      _
    // Predicated region
    $region6: #{lstm_baseline_forward.1} parent=1 // pred_check
      _
    $region7: #{lstm_baseline_forward.1} parent=1 // pred_check_branch
      %19 = sbr.rel (0) target = $region9
    $region8: #{lstm_baseline_forward.1} parent=1 // pred_region
      _
    $region9: #{lstm_baseline_forward.1} parent=1 // pred_fallthru
      _
    // Predicated region
    $region10: #{lstm_baseline_forward.1} parent=1 // pred_check
      _
    $region11: #{lstm_baseline_forward.1} parent=1 // pred_check_branch
      %21 = sbr.rel (0) target = $region13
    $region12: #{lstm_baseline_forward.1} parent=1 // pred_region
      _
    $region13: #{lstm_baseline_forward.1} parent=1 // pred_fallthru
      _
    // Predicated region
    $region14: #{lstm_baseline_forward.1} parent=1 // pred_check
      _
    $region15: #{lstm_baseline_forward.1} parent=1 // pred_check_branch
      %23 = sbr.rel (0) target = $region17
    $region16: #{lstm_baseline_forward.1} parent=1 // pred_region
      _
    $region17: #{lstm_baseline_forward.1} parent=1 // pred_fallthru
      _
    // Predicated region
    $region18: #{lstm_baseline_forward.1} parent=1 // pred_check
      _
    $region19: #{lstm_baseline_forward.1} parent=1 // pred_check_branch
      %25 = sbr.rel (0) target = $region21
    $region20: #{lstm_baseline_forward.1} parent=1 // pred_region
      _
    $region21: #{lstm_baseline_forward.1} parent=1 // pred_fallthru
      _
    // Predicated region
    $region22: #{lstm_baseline_forward.1} parent=1 // pred_check
      _
    $region23: #{lstm_baseline_forward.1} parent=1 // pred_check_branch
      %27 = sbr.rel (0) target = $region25
    $region24: #{lstm_baseline_forward.1} parent=1 // pred_region
      _
    $region25: #{lstm_baseline_forward.1} parent=1 // pred_fallthru
      _
    // Predicated region
    $region26: #{lstm_baseline_forward.1} parent=1 // pred_check
      _
    $region27: #{lstm_baseline_forward.1} parent=1 // pred_check_branch
      %29 = sbr.rel (0) target = $region29
    $region28: #{lstm_baseline_forward.1} parent=1 // pred_region
      _
    $region29: #{lstm_baseline_forward.1} parent=1 // pred_fallthru
      _
    // Predicated region
    $region30: #{lstm_baseline_forward.1} parent=1 // pred_check
      _
    $region31: #{lstm_baseline_forward.1} parent=1 // pred_check_branch
      %31 = sbr.rel (0) target = $region33
    $region32: #{lstm_baseline_forward.1} parent=1 // pred_region
      _
    $region33: #{lstm_baseline_forward.1} parent=1 // pred_fallthru
      _
    // Predicated region
    $region34: #{lstm_baseline_forward.1} parent=1 // pred_check
      _
    $region35: #{lstm_baseline_forward.1} parent=1 // pred_check_branch
      %34 = sbr.rel target = $region37
    $region36: #{lstm_baseline_forward.1} parent=1 // pred_region
      %35 = sst [smem:[#allocation10]] [#allocation9]
      %36 = sst [smem:[#allocation11]] [#allocation8]
    $region37: #{lstm_baseline_forward.1} parent=1 // pred_fallthru
      _
    %38 = shalt.err (0)
    %s40 = sshll.u32 %s3, 4
    %s41 = int_to_ptr.hbm [resolvable:$true] %s40
    %s42 = sshll.u32 [#allocation2], 4
    %s43 = int_to_ptr.vmem [resolvable:$true] %s42
    %45 = dma.hbm_to_vmem [thread:$0]  %s41, 4096, %s43, [#allocation5]
    %s46 = scalar_lea.sflag [#allocation5], 1
    // Predicated region
    $region38: #{lstm_baseline_forward.1} parent=1 // pred_check
      _
    $region39: #{lstm_baseline_forward.1} parent=1 // pred_check_branch
      %48 = sbr.rel target = $region41
    $region40: #{lstm_baseline_forward.1} parent=1 // pred_region
      %49 = sst [smem:[#allocation10]] [#allocation13]
      %50 = sst [smem:[#allocation11]] [#allocation12]
    $region41: #{lstm_baseline_forward.1} parent=1 // pred_fallthru
      _
    %52 = shalt.err (0)
    %s54 = sshll.u32 %s4, 4
    %s55 = int_to_ptr.hbm [resolvable:$true] %s54
    %s56 = sshll.u32 [#allocation3], 4
    %s57 = int_to_ptr.vmem [resolvable:$true] %s56
    %59 = dma.hbm_to_vmem [thread:$0]  %s55, 3072, %s57, %s46
    %v60 = vld [vmem:[%s0] sm:$0xff]
    %v61 = vld [vmem:[%s0 + $0x8] sm:$0xff]
    %v62 = vld [vmem:[%s0 + $0x10] sm:$0xff]
    %v63 = vld [vmem:[%s0 + $0x18] sm:$0xff]
    %v64 = vld [vmem:[%s0 + $0x20] sm:$0xff]
    %v65 = vld [vmem:[%s0 + $0x28] sm:$0xff]
    %v66 = vld [vmem:[%s0 + $0x30] sm:$0xff]
    %v67 = vld [vmem:[%s0 + $0x38] sm:$0xff]
    %v68 = vld [vmem:[%s1] sm:$0xff]
    %v69 = vld [vmem:[%s1 + $0x8] sm:$0xff]
    %v70 = vld [vmem:[%s2] sm:$0xf]
    %72 = vset.pattern.permute.xlu0 0
    %73 = vperm.xlu0 %72, %v60
    %v74 = vpop.permute.xlu0 %73
    %77 = vset.pattern.permute.xlu0 0
    %78 = vperm.xlu0 %77, %v61
    %v79 = vpop.permute.xlu0 %78
    %82 = vset.pattern.permute.xlu0 0
    %83 = vperm.xlu0 %82, %v62
    %v84 = vpop.permute.xlu0 %83
    %87 = vset.pattern.permute.xlu0 0
    %88 = vperm.xlu0 %87, %v63
    %v89 = vpop.permute.xlu0 %88
    %92 = vset.pattern.permute.xlu0 0
    %93 = vperm.xlu0 %92, %v64
    %v94 = vpop.permute.xlu0 %93
    %97 = vset.pattern.permute.xlu0 0
    %98 = vperm.xlu0 %97, %v65
    %v99 = vpop.permute.xlu0 %98
    %102 = vset.pattern.permute.xlu0 0
    %103 = vperm.xlu0 %102, %v66
    %v104 = vpop.permute.xlu0 %103
    %107 = vset.pattern.permute.xlu0 0
    %108 = vperm.xlu0 %107, %v67
    %v109 = vpop.permute.xlu0 %108
    %v113 = vperm.slane %v68, 0
    %v114 = vperm.slane %v68, 4
    %v115 = vperm.slane %v69, 0
    %v116 = vperm.slane %v69, 4
    %v121 = vperm.slane %v113, 0
    %v122 = vperm.slane %v114, 0
    %v123 = vperm.slane %v115, 0
    %v124 = vperm.slane %v116, 0
    %v125 = vmul.f32 %v74, %v121
    %v126 = vmul.f32 %v74, %v122
    %v127 = vmul.f32 %v74, %v123
    %v128 = vmul.f32 %v74, %v124
    %v129 = vmul.f32 %v79, %v121
    %v130 = vmul.f32 %v79, %v122
    %v131 = vmul.f32 %v79, %v123
    %v132 = vmul.f32 %v79, %v124
    %v133 = vmul.f32 %v84, %v121
    %v134 = vmul.f32 %v84, %v122
    %v135 = vmul.f32 %v84, %v123
    %v136 = vmul.f32 %v84, %v124
    %v137 = vmul.f32 %v89, %v121
    %v138 = vmul.f32 %v89, %v122
    %v139 = vmul.f32 %v89, %v123
    %v140 = vmul.f32 %v89, %v124
    %v141 = vmul.f32 %v94, %v121
    %v142 = vmul.f32 %v94, %v122
    %v143 = vmul.f32 %v94, %v123
    %v144 = vmul.f32 %v94, %v124
    %v145 = vmul.f32 %v99, %v121
    %v146 = vmul.f32 %v99, %v122
    %v147 = vmul.f32 %v99, %v123
    %v148 = vmul.f32 %v99, %v124
    %v149 = vmul.f32 %v104, %v121
    %v150 = vmul.f32 %v104, %v122
    %v151 = vmul.f32 %v104, %v123
    %v152 = vmul.f32 %v104, %v124
    %v153 = vmul.f32 %v109, %v121
    %v154 = vmul.f32 %v109, %v122
    %v155 = vmul.f32 %v109, %v123
    %v156 = vmul.f32 %v109, %v124
    %v158 = vperm.slane %v70, 0
    %v159 = vperm.slane %v70, 1
    %v160 = vperm.slane %v70, 2
    %v161 = vperm.slane %v70, 3
    %v166 = vadd.f32 %v125, %v158
    %v167 = vadd.f32 %v126, %v159
    %v168 = vadd.f32 %v127, %v160
    %v169 = vadd.f32 %v128, %v161
    %v170 = vadd.f32 %v129, %v158
    %v171 = vadd.f32 %v130, %v159
    %v172 = vadd.f32 %v131, %v160
    %v173 = vadd.f32 %v132, %v161
    %v174 = vadd.f32 %v133, %v158
    %v175 = vadd.f32 %v134, %v159
    %v176 = vadd.f32 %v135, %v160
    %v177 = vadd.f32 %v136, %v161
    %v178 = vadd.f32 %v137, %v158
    %v179 = vadd.f32 %v138, %v159
    %v180 = vadd.f32 %v139, %v160
    %v181 = vadd.f32 %v140, %v161
    %v182 = vadd.f32 %v141, %v158
    %v183 = vadd.f32 %v142, %v159
    %v184 = vadd.f32 %v143, %v160
    %v185 = vadd.f32 %v144, %v161
    %v186 = vadd.f32 %v145, %v158
    %v187 = vadd.f32 %v146, %v159
    %v188 = vadd.f32 %v147, %v160
    %v189 = vadd.f32 %v148, %v161
    %v190 = vadd.f32 %v149, %v158
    %v191 = vadd.f32 %v150, %v159
    %v192 = vadd.f32 %v151, %v160
    %v193 = vadd.f32 %v152, %v161
    %v194 = vadd.f32 %v153, %v158
    %v195 = vadd.f32 %v154, %v159
    %v196 = vadd.f32 %v155, %v160
    %v197 = vadd.f32 %v156, %v161
    %198 = vset.pattern.permute.xlu0 1
    %199 = vperm.xlu0 %198, %v60
    %v200 = vpop.permute.xlu0 %199
    %202 = vset.pattern.permute.xlu0 1
    %203 = vperm.xlu0 %202, %v61
    %v204 = vpop.permute.xlu0 %203
    %206 = vset.pattern.permute.xlu0 1
    %207 = vperm.xlu0 %206, %v62
    %v208 = vpop.permute.xlu0 %207
    %210 = vset.pattern.permute.xlu0 1
    %211 = vperm.xlu0 %210, %v63
    %v212 = vpop.permute.xlu0 %211
    %214 = vset.pattern.permute.xlu0 1
    %215 = vperm.xlu0 %214, %v64
    %v216 = vpop.permute.xlu0 %215
    %218 = vset.pattern.permute.xlu0 1
    %219 = vperm.xlu0 %218, %v65
    %v220 = vpop.permute.xlu0 %219
    %222 = vset.pattern.permute.xlu0 1
    %223 = vperm.xlu0 %222, %v66
    %v224 = vpop.permute.xlu0 %223
    %226 = vset.pattern.permute.xlu0 1
    %227 = vperm.xlu0 %226, %v67
    %v228 = vpop.permute.xlu0 %227
    %v230 = vperm.slane %v68, 1
    %v231 = vperm.slane %v68, 5
    %v232 = vperm.slane %v69, 1
    %v233 = vperm.slane %v69, 5
    %v238 = vperm.slane %v230, 1
    %v239 = vperm.slane %v231, 1
    %v240 = vperm.slane %v232, 1
    %v241 = vperm.slane %v233, 1
    %v242 = vmul.f32 %v200, %v238
    %v243 = vmul.f32 %v200, %v239
    %v244 = vmul.f32 %v200, %v240
    %v245 = vmul.f32 %v200, %v241
    %v246 = vmul.f32 %v204, %v238
    %v247 = vmul.f32 %v204, %v239
    %v248 = vmul.f32 %v204, %v240
    %v249 = vmul.f32 %v204, %v241
    %v250 = vmul.f32 %v208, %v238
    %v251 = vmul.f32 %v208, %v239
    %v252 = vmul.f32 %v208, %v240
    %v253 = vmul.f32 %v208, %v241
    %v254 = vmul.f32 %v212, %v238
    %v255 = vmul.f32 %v212, %v239
    %v256 = vmul.f32 %v212, %v240
    %v257 = vmul.f32 %v212, %v241
    %v258 = vmul.f32 %v216, %v238
    %v259 = vmul.f32 %v216, %v239
    %v260 = vmul.f32 %v216, %v240
    %v261 = vmul.f32 %v216, %v241
    %v262 = vmul.f32 %v220, %v238
    %v263 = vmul.f32 %v220, %v239
    %v264 = vmul.f32 %v220, %v240
    %v265 = vmul.f32 %v220, %v241
    %v266 = vmul.f32 %v224, %v238
    %v267 = vmul.f32 %v224, %v239
    %v268 = vmul.f32 %v224, %v240
    %v269 = vmul.f32 %v224, %v241
    %v270 = vmul.f32 %v228, %v238
    %v271 = vmul.f32 %v228, %v239
    %v272 = vmul.f32 %v228, %v240
    %v273 = vmul.f32 %v228, %v241
    %v274 = vadd.f32 %v166, %v242
    %v275 = vadd.f32 %v167, %v243
    %v276 = vadd.f32 %v168, %v244
    %v277 = vadd.f32 %v169, %v245
    %v278 = vadd.f32 %v170, %v246
    %v279 = vadd.f32 %v171, %v247
    %v280 = vadd.f32 %v172, %v248
    %v281 = vadd.f32 %v173, %v249
    %v282 = vadd.f32 %v174, %v250
    %v283 = vadd.f32 %v175, %v251
    %v284 = vadd.f32 %v176, %v252
    %v285 = vadd.f32 %v177, %v253
    %v286 = vadd.f32 %v178, %v254
    %v287 = vadd.f32 %v179, %v255
    %v288 = vadd.f32 %v180, %v256
    %v289 = vadd.f32 %v181, %v257
    %v290 = vadd.f32 %v182, %v258
    %v291 = vadd.f32 %v183, %v259
    %v292 = vadd.f32 %v184, %v260
    %v293 = vadd.f32 %v185, %v261
    %v294 = vadd.f32 %v186, %v262
    %v295 = vadd.f32 %v187, %v263
    %v296 = vadd.f32 %v188, %v264
    %v297 = vadd.f32 %v189, %v265
    %v298 = vadd.f32 %v190, %v266
    %v299 = vadd.f32 %v191, %v267
    %v300 = vadd.f32 %v192, %v268
    %v301 = vadd.f32 %v193, %v269
    %v302 = vadd.f32 %v194, %v270
    %v303 = vadd.f32 %v195, %v271
    %v304 = vadd.f32 %v196, %v272
    %v305 = vadd.f32 %v197, %v273
    %306 = vset.pattern.permute.xlu0 2
    %307 = vperm.xlu0 %306, %v60
    %v308 = vpop.permute.xlu0 %307
    %310 = vset.pattern.permute.xlu0 2
    %311 = vperm.xlu0 %310, %v61
    %v312 = vpop.permute.xlu0 %311
    %314 = vset.pattern.permute.xlu0 2
    %315 = vperm.xlu0 %314, %v62
    %v316 = vpop.permute.xlu0 %315
    %318 = vset.pattern.permute.xlu0 2
    %319 = vperm.xlu0 %318, %v63
    %v320 = vpop.permute.xlu0 %319
    %322 = vset.pattern.permute.xlu0 2
    %323 = vperm.xlu0 %322, %v64
    %v324 = vpop.permute.xlu0 %323
    %326 = vset.pattern.permute.xlu0 2
    %327 = vperm.xlu0 %326, %v65
    %v328 = vpop.permute.xlu0 %327
    %330 = vset.pattern.permute.xlu0 2
    %331 = vperm.xlu0 %330, %v66
    %v332 = vpop.permute.xlu0 %331
    %334 = vset.pattern.permute.xlu0 2
    %335 = vperm.xlu0 %334, %v67
    %v336 = vpop.permute.xlu0 %335
    %v338 = vperm.slane %v68, 2
    %v339 = vperm.slane %v68, 6
    %v340 = vperm.slane %v69, 2
    %v341 = vperm.slane %v69, 6
    %v346 = vperm.slane %v338, 2
    %v347 = vperm.slane %v339, 2
    %v348 = vperm.slane %v340, 2
    %v349 = vperm.slane %v341, 2
    %v350 = vmul.f32 %v308, %v346
    %v351 = vmul.f32 %v308, %v347
    %v352 = vmul.f32 %v308, %v348
    %v353 = vmul.f32 %v308, %v349
    %v354 = vmul.f32 %v312, %v346
    %v355 = vmul.f32 %v312, %v347
    %v356 = vmul.f32 %v312, %v348
    %v357 = vmul.f32 %v312, %v349
    %v358 = vmul.f32 %v316, %v346
    %v359 = vmul.f32 %v316, %v347
    %v360 = vmul.f32 %v316, %v348
    %v361 = vmul.f32 %v316, %v349
    %v362 = vmul.f32 %v320, %v346
    %v363 = vmul.f32 %v320, %v347
    %v364 = vmul.f32 %v320, %v348
    %v365 = vmul.f32 %v320, %v349
    %v366 = vmul.f32 %v324, %v346
    %v367 = vmul.f32 %v324, %v347
    %v368 = vmul.f32 %v324, %v348
    %v369 = vmul.f32 %v324, %v349
    %v370 = vmul.f32 %v328, %v346
    %v371 = vmul.f32 %v328, %v347
    %v372 = vmul.f32 %v328, %v348
    %v373 = vmul.f32 %v328, %v349
    %v374 = vmul.f32 %v332, %v346
    %v375 = vmul.f32 %v332, %v347
    %v376 = vmul.f32 %v332, %v348
    %v377 = vmul.f32 %v332, %v349
    %v378 = vmul.f32 %v336, %v346
    %v379 = vmul.f32 %v336, %v347
    %v380 = vmul.f32 %v336, %v348
    %v381 = vmul.f32 %v336, %v349
    %v382 = vadd.f32 %v274, %v350
    %v383 = vadd.f32 %v275, %v351
    %v384 = vadd.f32 %v276, %v352
    %v385 = vadd.f32 %v277, %v353
    %v386 = vadd.f32 %v278, %v354
    %v387 = vadd.f32 %v279, %v355
    %v388 = vadd.f32 %v280, %v356
    %v389 = vadd.f32 %v281, %v357
    %v390 = vadd.f32 %v282, %v358
    %v391 = vadd.f32 %v283, %v359
    %v392 = vadd.f32 %v284, %v360
    %v393 = vadd.f32 %v285, %v361
    %v394 = vadd.f32 %v286, %v362
    %v395 = vadd.f32 %v287, %v363
    %v396 = vadd.f32 %v288, %v364
    %v397 = vadd.f32 %v289, %v365
    %v398 = vadd.f32 %v290, %v366
    %v399 = vadd.f32 %v291, %v367
    %v400 = vadd.f32 %v292, %v368
    %v401 = vadd.f32 %v293, %v369
    %v402 = vadd.f32 %v294, %v370
    %v403 = vadd.f32 %v295, %v371
    %v404 = vadd.f32 %v296, %v372
    %v405 = vadd.f32 %v297, %v373
    %v406 = vadd.f32 %v298, %v374
    %v407 = vadd.f32 %v299, %v375
    %v408 = vadd.f32 %v300, %v376
    %v409 = vadd.f32 %v301, %v377
    %v410 = vadd.f32 %v302, %v378
    %v411 = vadd.f32 %v303, %v379
    %v412 = vadd.f32 %v304, %v380
    %v413 = vadd.f32 %v305, %v381
    %414 = vset.pattern.permute.xlu0 3
    %415 = vperm.xlu0 %414, %v60
    %v416 = vpop.permute.xlu0 %415
    %418 = vset.pattern.permute.xlu0 3
    %419 = vperm.xlu0 %418, %v61
    %v420 = vpop.permute.xlu0 %419
    %422 = vset.pattern.permute.xlu0 3
    %423 = vperm.xlu0 %422, %v62
    %v424 = vpop.permute.xlu0 %423
    %426 = vset.pattern.permute.xlu0 3
    %427 = vperm.xlu0 %426, %v63
    %v428 = vpop.permute.xlu0 %427
    %430 = vset.pattern.permute.xlu0 3
    %431 = vperm.xlu0 %430, %v64
    %v432 = vpop.permute.xlu0 %431
    %434 = vset.pattern.permute.xlu0 3
    %435 = vperm.xlu0 %434, %v65
    %v436 = vpop.permute.xlu0 %435
    %438 = vset.pattern.permute.xlu0 3
    %439 = vperm.xlu0 %438, %v66
    %v440 = vpop.permute.xlu0 %439
    %442 = vset.pattern.permute.xlu0 3
    %443 = vperm.xlu0 %442, %v67
    %v444 = vpop.permute.xlu0 %443
    %v446 = vperm.slane %v68, 3
    %v447 = vperm.slane %v68, 7
    %v448 = vperm.slane %v69, 3
    %v449 = vperm.slane %v69, 7
    %v454 = vperm.slane %v446, 3
    %v455 = vperm.slane %v447, 3
    %v456 = vperm.slane %v448, 3
    %v457 = vperm.slane %v449, 3
    %v458 = vmul.f32 %v416, %v454
    %v459 = vmul.f32 %v416, %v455
    %v460 = vmul.f32 %v416, %v456
    %v461 = vmul.f32 %v416, %v457
    %v462 = vmul.f32 %v420, %v454
    %v463 = vmul.f32 %v420, %v455
    %v464 = vmul.f32 %v420, %v456
    %v465 = vmul.f32 %v420, %v457
    %v466 = vmul.f32 %v424, %v454
    %v467 = vmul.f32 %v424, %v455
    %v468 = vmul.f32 %v424, %v456
    %v469 = vmul.f32 %v424, %v457
    %v470 = vmul.f32 %v428, %v454
    %v471 = vmul.f32 %v428, %v455
    %v472 = vmul.f32 %v428, %v456
    %v473 = vmul.f32 %v428, %v457
    %v474 = vmul.f32 %v432, %v454
    %v475 = vmul.f32 %v432, %v455
    %v476 = vmul.f32 %v432, %v456
    %v477 = vmul.f32 %v432, %v457
    %v478 = vmul.f32 %v436, %v454
    %v479 = vmul.f32 %v436, %v455
    %v480 = vmul.f32 %v436, %v456
    %v481 = vmul.f32 %v436, %v457
    %v482 = vmul.f32 %v440, %v454
    %v483 = vmul.f32 %v440, %v455
    %v484 = vmul.f32 %v440, %v456
    %v485 = vmul.f32 %v440, %v457
    %v486 = vmul.f32 %v444, %v454
    %v487 = vmul.f32 %v444, %v455
    %v488 = vmul.f32 %v444, %v456
    %v489 = vmul.f32 %v444, %v457
    %v490 = vadd.f32 %v382, %v458
    %v491 = vadd.f32 %v383, %v459
    %v492 = vadd.f32 %v384, %v460
    %v493 = vadd.f32 %v385, %v461
    %v494 = vadd.f32 %v386, %v462
    %v495 = vadd.f32 %v387, %v463
    %v496 = vadd.f32 %v388, %v464
    %v497 = vadd.f32 %v389, %v465
    %v498 = vadd.f32 %v390, %v466
    %v499 = vadd.f32 %v391, %v467
    %v500 = vadd.f32 %v392, %v468
    %v501 = vadd.f32 %v393, %v469
    %v502 = vadd.f32 %v394, %v470
    %v503 = vadd.f32 %v395, %v471
    %v504 = vadd.f32 %v396, %v472
    %v505 = vadd.f32 %v397, %v473
    %v506 = vadd.f32 %v398, %v474
    %v507 = vadd.f32 %v399, %v475
    %v508 = vadd.f32 %v400, %v476
    %v509 = vadd.f32 %v401, %v477
    %v510 = vadd.f32 %v402, %v478
    %v511 = vadd.f32 %v403, %v479
    %v512 = vadd.f32 %v404, %v480
    %v513 = vadd.f32 %v405, %v481
    %v514 = vadd.f32 %v406, %v482
    %v515 = vadd.f32 %v407, %v483
    %v516 = vadd.f32 %v408, %v484
    %v517 = vadd.f32 %v409, %v485
    %v518 = vadd.f32 %v410, %v486
    %v519 = vadd.f32 %v411, %v487
    %v520 = vadd.f32 %v412, %v488
    %v521 = vadd.f32 %v413, %v489
    %522 = vst [vmem:[#allocation4] sm:$0xff] %v490
    %523 = vst [vmem:[#allocation4 + $0x8] sm:$0xff] %v491
    %524 = vst [vmem:[#allocation4 + $0x10] sm:$0xff] %v492
    %525 = vst [vmem:[#allocation4 + $0x18] sm:$0xff] %v493
    %526 = vst [vmem:[#allocation4 + $0x20] sm:$0xff] %v494
    %527 = vst [vmem:[#allocation4 + $0x28] sm:$0xff] %v495
    %528 = vst [vmem:[#allocation4 + $0x30] sm:$0xff] %v496
    %529 = vst [vmem:[#allocation4 + $0x38] sm:$0xff] %v497
    %530 = vst [vmem:[#allocation4 + $0x40] sm:$0xff] %v498
    %531 = vst [vmem:[#allocation4 + $0x48] sm:$0xff] %v499
    %532 = vst [vmem:[#allocation4 + $0x50] sm:$0xff] %v500
    %533 = vst [vmem:[#allocation4 + $0x58] sm:$0xff] %v501
    %534 = vst [vmem:[#allocation4 + $0x60] sm:$0xff] %v502
    %535 = vst [vmem:[#allocation4 + $0x68] sm:$0xff] %v503
    %536 = vst [vmem:[#allocation4 + $0x70] sm:$0xff] %v504
    %537 = vst [vmem:[#allocation4 + $0x78] sm:$0xff] %v505
    %538 = vst [vmem:[#allocation4 + $0x80] sm:$0xff] %v506
    %539 = vst [vmem:[#allocation4 + $0x88] sm:$0xff] %v507
    %540 = vst [vmem:[#allocation4 + $0x90] sm:$0xff] %v508
    %541 = vst [vmem:[#allocation4 + $0x98] sm:$0xff] %v509
    %542 = vst [vmem:[#allocation4 + $0xa0] sm:$0xff] %v510
    %543 = vst [vmem:[#allocation4 + $0xa8] sm:$0xff] %v511
    %544 = vst [vmem:[#allocation4 + $0xb0] sm:$0xff] %v512
    %545 = vst [vmem:[#allocation4 + $0xb8] sm:$0xff] %v513
    %546 = vst [vmem:[#allocation4 + $0xc0] sm:$0xff] %v514
    %547 = vst [vmem:[#allocation4 + $0xc8] sm:$0xff] %v515
    %548 = vst [vmem:[#allocation4 + $0xd0] sm:$0xff] %v516
    %549 = vst [vmem:[#allocation4 + $0xd8] sm:$0xff] %v517
    %550 = vst [vmem:[#allocation4 + $0xe0] sm:$0xff] %v518
    %551 = vst [vmem:[#allocation4 + $0xe8] sm:$0xff] %v519
    %552 = vst [vmem:[#allocation4 + $0xf0] sm:$0xff] %v520
    %553 = vst [vmem:[#allocation4 + $0xf8] sm:$0xff] %v521
    %v554 = vlaneseq
    %v555 = vand.u32 %v554, 127
    %v556 = vadd.s32 %v555, 128
    %v557 = vadd.s32 %v555, 256
    %v558 = vadd.s32 %v555, 384
    %vm559 = vcmp.ge.s32.totalorder %v555, 256
    %vm560 = vcmp.ge.s32.totalorder %v556, 256
    %vm561 = vcmp.ge.s32.totalorder %v557, 256
    %vm562 = vcmp.ge.s32.totalorder %v558, 256
    %vm563 = vcmp.lt.s32.totalorder %v555, 384
    %vm564 = vcmp.lt.s32.totalorder %v556, 384
    %vm565 = vcmp.lt.s32.totalorder %v557, 384
    %vm566 = vcmp.lt.s32.totalorder %v558, 384
    %vm567 = vmand %vm559, %vm563
    %vm568 = vmand %vm560, %vm564
    %vm569 = vmand %vm561, %vm565
    %vm570 = vmand %vm562, %vm566
    %v571 = vsel %vm567, 1.0, 0.5
    %v572 = vsel %vm568, 1.0, 0.5
    %v573 = vsel %vm569, 1.0, 0.5
    %v574 = vsel %vm570, 1.0, 0.5
    %vm575 = vcmp.ge.s32.totalorder %v555, 128
    %vm576 = vcmp.ge.s32.totalorder %v556, 128
    %vm577 = vcmp.lt.s32.totalorder %v555, 192
    %vm578 = vcmp.lt.s32.totalorder %v556, 192
    %vm579 = vmand %vm575, %vm577
    %vm580 = vmand %vm576, %vm578
    %v581 = vsel %vm579, 1.0, 0.5
    %v582 = vsel %vm580, 1.0, 0.5
    %v583 = vld [vmem:[%s5] sm:$0x3]
    %s584 = smul.u32 4, 16
    %s585 = smul.u32 %s584, 4
    %s586 = sshll.u32 %s585, 4
    %587 = dma.done [#allocation5], %s586
    %s588 = smul.u32 4, 24
    %s589 = smul.u32 %s588, 2
    %s590 = sshll.u32 %s589, 4
    %591 = dma.done %s46, %s590
    %v592 = vld [vmem:[#allocation4] sm:$0xff]
    %v593 = vld [vmem:[#allocation4 + $0x8] sm:$0xff]
    %v594 = vld [vmem:[#allocation4 + $0x10] sm:$0xff]
    %v595 = vld [vmem:[#allocation4 + $0x18] sm:$0xff]
    %v596 = vld [vmem:[#allocation2] sm:$0xff]
    %v597 = vld [vmem:[#allocation2 + $0x8] sm:$0xff]
    %v598 = vld [vmem:[#allocation2 + $0x10] sm:$0xff]
    %v599 = vld [vmem:[#allocation2 + $0x18] sm:$0xff]
    %v600 = vld [vmem:[#allocation2 + $0x20] sm:$0xff]
    %v601 = vld [vmem:[#allocation2 + $0x28] sm:$0xff]
    %v602 = vld [vmem:[#allocation2 + $0x30] sm:$0xff]
    %v603 = vld [vmem:[#allocation2 + $0x38] sm:$0xff]
    %v604 = vld [vmem:[#allocation2 + $0x40] sm:$0xff]
    %v605 = vld [vmem:[#allocation2 + $0x48] sm:$0xff]
    %v606 = vld [vmem:[#allocation2 + $0x50] sm:$0xff]
    %v607 = vld [vmem:[#allocation2 + $0x58] sm:$0xff]
    %v608 = vld [vmem:[#allocation2 + $0x60] sm:$0xff]
    %v609 = vld [vmem:[#allocation2 + $0x68] sm:$0xff]
    %v610 = vld [vmem:[#allocation2 + $0x70] sm:$0xff]
    %v611 = vld [vmem:[#allocation2 + $0x78] sm:$0xff]
    %v612 = vld [vmem:[#allocation2 + $0x80] sm:$0xff]
    %v613 = vld [vmem:[#allocation2 + $0x88] sm:$0xff]
    %v614 = vld [vmem:[#allocation2 + $0x90] sm:$0xff]
    %v615 = vld [vmem:[#allocation2 + $0x98] sm:$0xff]
    %v616 = vld [vmem:[#allocation2 + $0xa0] sm:$0xff]
    %v617 = vld [vmem:[#allocation2 + $0xa8] sm:$0xff]
    %v618 = vld [vmem:[#allocation2 + $0xb0] sm:$0xff]
    %v619 = vld [vmem:[#allocation2 + $0xb8] sm:$0xff]
    %v620 = vld [vmem:[#allocation2 + $0xc0] sm:$0xff]
    %v621 = vld [vmem:[#allocation2 + $0xc8] sm:$0xff]
    %v622 = vld [vmem:[#allocation2 + $0xd0] sm:$0xff]
    %v623 = vld [vmem:[#allocation2 + $0xd8] sm:$0xff]
    %v624 = vld [vmem:[#allocation2 + $0xe0] sm:$0xff]
    %v625 = vld [vmem:[#allocation2 + $0xe8] sm:$0xff]
    %v626 = vld [vmem:[#allocation2 + $0xf0] sm:$0xff]
    %v627 = vld [vmem:[#allocation2 + $0xf8] sm:$0xff]
    %v660 = vunpack.c.l.b16 %v596
    %v661 = vunpack.c.h.b16 %v596
    %v662 = vunpack.c.l.b16 %v597
    %v663 = vunpack.c.h.b16 %v597
    %v664 = vunpack.c.l.b16 %v598
    %v665 = vunpack.c.h.b16 %v598
    %v666 = vunpack.c.l.b16 %v599
    %v667 = vunpack.c.h.b16 %v599
    %v668 = vunpack.c.l.b16 %v600
    %v669 = vunpack.c.h.b16 %v600
    %v670 = vunpack.c.l.b16 %v601
    %v671 = vunpack.c.h.b16 %v601
    %v672 = vunpack.c.l.b16 %v602
    %v673 = vunpack.c.h.b16 %v602
    %v674 = vunpack.c.l.b16 %v603
    %v675 = vunpack.c.h.b16 %v603
    %v676 = vunpack.c.l.b16 %v604
    %v677 = vunpack.c.h.b16 %v604
    %v678 = vunpack.c.l.b16 %v605
    %v679 = vunpack.c.h.b16 %v605
    %v680 = vunpack.c.l.b16 %v606
    %v681 = vunpack.c.h.b16 %v606
    %v682 = vunpack.c.l.b16 %v607
    %v683 = vunpack.c.h.b16 %v607
    %v684 = vunpack.c.l.b16 %v608
    %v685 = vunpack.c.h.b16 %v608
    %v686 = vunpack.c.l.b16 %v609
    %v687 = vunpack.c.h.b16 %v609
    %v688 = vunpack.c.l.b16 %v610
    %v689 = vunpack.c.h.b16 %v610
    %v690 = vunpack.c.l.b16 %v611
    %v691 = vunpack.c.h.b16 %v611
    %v692 = vunpack.c.l.b16 %v612
    %v693 = vunpack.c.h.b16 %v612
    %v694 = vunpack.c.l.b16 %v613
    %v695 = vunpack.c.h.b16 %v613
    %v696 = vunpack.c.l.b16 %v614
    %v697 = vunpack.c.h.b16 %v614
    %v698 = vunpack.c.l.b16 %v615
    %v699 = vunpack.c.h.b16 %v615
    %v700 = vunpack.c.l.b16 %v616
    %v701 = vunpack.c.h.b16 %v616
    %v702 = vunpack.c.l.b16 %v617
    %v703 = vunpack.c.h.b16 %v617
    %v704 = vunpack.c.l.b16 %v618
    %v705 = vunpack.c.h.b16 %v618
    %v706 = vunpack.c.l.b16 %v619
    %v707 = vunpack.c.h.b16 %v619
    %v708 = vunpack.c.l.b16 %v620
    %v709 = vunpack.c.h.b16 %v620
    %v710 = vunpack.c.l.b16 %v621
    %v711 = vunpack.c.h.b16 %v621
    %v712 = vunpack.c.l.b16 %v622
    %v713 = vunpack.c.h.b16 %v622
    %v714 = vunpack.c.l.b16 %v623
    %v715 = vunpack.c.h.b16 %v623
    %v716 = vunpack.c.l.b16 %v624
    %v717 = vunpack.c.h.b16 %v624
    %v718 = vunpack.c.l.b16 %v625
    %v719 = vunpack.c.h.b16 %v625
    %v720 = vunpack.c.l.b16 %v626
    %v721 = vunpack.c.h.b16 %v626
    %v722 = vunpack.c.l.b16 %v627
    %v723 = vunpack.c.h.b16 %v627
    %v724 = vpack.c.b16 %v664, %v660
    %v725 = vpack.c.b16 %v665, %v661
    %v726 = vpack.c.b16 %v666, %v662
    %v727 = vpack.c.b16 %v667, %v663
    %v728 = vpack.c.b16 %v672, %v668
    %v729 = vpack.c.b16 %v673, %v669
    %v730 = vpack.c.b16 %v674, %v670
    %v731 = vpack.c.b16 %v675, %v671
    %v732 = vpack.c.b16 %v680, %v676
    %v733 = vpack.c.b16 %v681, %v677
    %v734 = vpack.c.b16 %v682, %v678
    %v735 = vpack.c.b16 %v683, %v679
    %v736 = vpack.c.b16 %v688, %v684
    %v737 = vpack.c.b16 %v689, %v685
    %v738 = vpack.c.b16 %v690, %v686
    %v739 = vpack.c.b16 %v691, %v687
    %v740 = vpack.c.b16 %v696, %v692
    %v741 = vpack.c.b16 %v697, %v693
    %v742 = vpack.c.b16 %v698, %v694
    %v743 = vpack.c.b16 %v699, %v695
    %v744 = vpack.c.b16 %v704, %v700
    %v745 = vpack.c.b16 %v705, %v701
    %v746 = vpack.c.b16 %v706, %v702
    %v747 = vpack.c.b16 %v707, %v703
    %v748 = vpack.c.b16 %v712, %v708
    %v749 = vpack.c.b16 %v713, %v709
    %v750 = vpack.c.b16 %v714, %v710
    %v751 = vpack.c.b16 %v715, %v711
    %v752 = vpack.c.b16 %v720, %v716
    %v753 = vpack.c.b16 %v721, %v717
    %v754 = vpack.c.b16 %v722, %v718
    %v755 = vpack.c.b16 %v723, %v719
    %788 = vmatpush.bf16.msra.mxu0 %v752
    %789 = vmatpush.bf16.msra.mxu0 %v748
    %790 = vmatpush.bf16.msra.mxu0 %v744
    %791 = vmatpush.bf16.msra.mxu0 %v740
    %792 = vmatpush.bf16.msra.mxu0 %v736
    %793 = vmatpush.bf16.msra.mxu0 %v732
    %794 = vmatpush.bf16.msra.mxu0 %v728
    %795 = vmatpush.bf16.msra.mxu0 %v724
    %796 = vmatmul.bf16.gmra.mxu0 0
    %v797 = vpop.f32.mrf.mxu0
    %v798 = vadd.f32 0.0, %v797
    %v799 = vpop.f32.mrf.mxu0
    %800 = vdwg.mxu0
    %801 = vmatpush.bf16.msra.mxu0 %v753
    %802 = vmatpush.bf16.msra.mxu0 %v749
    %803 = vmatpush.bf16.msra.mxu0 %v745
    %804 = vmatpush.bf16.msra.mxu0 %v741
    %805 = vmatpush.bf16.msra.mxu0 %v737
    %806 = vmatpush.bf16.msra.mxu0 %v733
    %807 = vmatpush.bf16.msra.mxu0 %v729
    %808 = vmatpush.bf16.msra.mxu0 %v725
    %809 = vmatmul.bf16.gmra.mxu0 0
    %v810 = vpop.f32.mrf.mxu0
    %v811 = vadd.f32 0.0, %v810
    %v812 = vpop.f32.mrf.mxu0
    %813 = vdwg.mxu0
    %814 = vmatpush.bf16.msra.mxu0 %v754
    %815 = vmatpush.bf16.msra.mxu0 %v750
    %816 = vmatpush.bf16.msra.mxu0 %v746
    %817 = vmatpush.bf16.msra.mxu0 %v742
    %818 = vmatpush.bf16.msra.mxu0 %v738
    %819 = vmatpush.bf16.msra.mxu0 %v734
    %820 = vmatpush.bf16.msra.mxu0 %v730
    %821 = vmatpush.bf16.msra.mxu0 %v726
    %822 = vmatmul.bf16.gmra.mxu0 0
    %v823 = vpop.f32.mrf.mxu0
    %v824 = vadd.f32 0.0, %v823
    %v825 = vpop.f32.mrf.mxu0
    %826 = vdwg.mxu0
    %827 = vmatpush.bf16.msra.mxu0 %v755
    %828 = vmatpush.bf16.msra.mxu0 %v751
    %829 = vmatpush.bf16.msra.mxu0 %v747
    %830 = vmatpush.bf16.msra.mxu0 %v743
    %831 = vmatpush.bf16.msra.mxu0 %v739
    %832 = vmatpush.bf16.msra.mxu0 %v735
    %833 = vmatpush.bf16.msra.mxu0 %v731
    %834 = vmatpush.bf16.msra.mxu0 %v727
    %835 = vmatmul.bf16.gmra.mxu0 0
    %v836 = vpop.f32.mrf.mxu0
    %v837 = vadd.f32 0.0, %v836
    %v838 = vpop.f32.mrf.mxu0
    %839 = vdwg.mxu0
    %v840 = vadd.f32 %v592, %v798
    %v841 = vadd.f32 %v593, %v811
    %v842 = vadd.f32 %v594, %v824
    %v843 = vadd.f32 %v595, %v837
    %v844 = vmul.f32 %v840, %v571
    %v845 = vmul.f32 %v841, %v572
    %v846 = vmul.f32 %v842, %v573
    %v847 = vmul.f32 %v843, %v574
    %v848 = vtanh.pop %v844
    %v849 = vtanh.pop %v845
    %v850 = vtanh.pop %v846
    %v851 = vtanh.pop %v847
    %v852 = vsub.f32 %v848, 1.0
    %v853 = vsub.f32 %v849, 1.0
    %v854 = vsub.f32 %v850, 1.0
    %v855 = vsub.f32 %v851, 1.0
    %v856 = vmul.f32 %v571, %v852
    %v857 = vmul.f32 %v572, %v853
    %v858 = vmul.f32 %v573, %v854
    %v859 = vmul.f32 %v574, %v855
    %v860 = vadd.f32 %v856, 1.0
    %v861 = vadd.f32 %v857, 1.0
    %v862 = vadd.f32 %v858, 1.0
    %v863 = vadd.f32 %v859, 1.0
    %v864 = vmul.f32 %v861, 0.0
    %v865 = vmul.f32 %v860, %v862
    %v866 = vadd.f32 %v864, %v865
    %v867 = vtanh.pop %v866
    %v868 = vmul.f32 %v863, %v867
    %v869 = vpack.c.bf16 %v868, %v868
    %v870 = vpack.c.bf16 0.0, 0.0
    %v871 = vld [vmem:[#allocation3] sm:$0xff]
    %v872 = vld [vmem:[#allocation3 + $0x8] sm:$0xff]
    %v873 = vld [vmem:[#allocation3 + $0x10] sm:$0xff]
    %v874 = vld [vmem:[#allocation3 + $0x18] sm:$0xff]
    %v875 = vld [vmem:[#allocation3 + $0x20] sm:$0xff]
    %v876 = vld [vmem:[#allocation3 + $0x28] sm:$0xff]
    %v877 = vld [vmem:[#allocation3 + $0x30] sm:$0xff]
    %v878 = vld [vmem:[#allocation3 + $0x38] sm:$0xff]
    %v879 = vld [vmem:[#allocation3 + $0x40] sm:$0xff]
    %v880 = vld [vmem:[#allocation3 + $0x48] sm:$0xff]
    %v881 = vld [vmem:[#allocation3 + $0x50] sm:$0xff]
    %v882 = vld [vmem:[#allocation3 + $0x58] sm:$0xff]
    %v883 = vld [vmem:[#allocation3 + $0x60] sm:$0xff]
    %v884 = vld [vmem:[#allocation3 + $0x68] sm:$0xff]
    %v885 = vld [vmem:[#allocation3 + $0x70] sm:$0xff]
    %v886 = vld [vmem:[#allocation3 + $0x78] sm:$0xff]
    %v887 = vld [vmem:[#allocation3 + $0x80] sm:$0xff]
    %v888 = vld [vmem:[#allocation3 + $0x88] sm:$0xff]
    %v889 = vld [vmem:[#allocation3 + $0x90] sm:$0xff]
    %v890 = vld [vmem:[#allocation3 + $0x98] sm:$0xff]
    %v891 = vld [vmem:[#allocation3 + $0xa0] sm:$0xff]
    %v892 = vld [vmem:[#allocation3 + $0xa8] sm:$0xff]
    %v893 = vld [vmem:[#allocation3 + $0xb0] sm:$0xff]
    %v894 = vld [vmem:[#allocation3 + $0xb8] sm:$0xff]
    %v896 = vperm.slane %v583, 0
    %v897 = vperm.slane %v583, 1
    %v924 = vunpack.c.l.b16 %v871
    %v925 = vunpack.c.h.b16 %v871
    %v926 = vunpack.c.l.b16 %v872
    %v927 = vunpack.c.h.b16 %v872
    %v928 = vunpack.c.l.b16 %v873
    %v929 = vunpack.c.h.b16 %v873
    %v930 = vunpack.c.l.b16 %v874
    %v931 = vunpack.c.h.b16 %v874
    %v932 = vunpack.c.l.b16 %v875
    %v933 = vunpack.c.h.b16 %v875
    %v934 = vunpack.c.l.b16 %v876
    %v935 = vunpack.c.h.b16 %v876
    %v936 = vunpack.c.l.b16 %v877
    %v937 = vunpack.c.h.b16 %v877
    %v938 = vunpack.c.l.b16 %v878
    %v939 = vunpack.c.h.b16 %v878
    %v940 = vunpack.c.l.b16 %v879
    %v941 = vunpack.c.h.b16 %v879
    %v942 = vunpack.c.l.b16 %v880
    %v943 = vunpack.c.h.b16 %v880
    %v944 = vunpack.c.l.b16 %v881
    %v945 = vunpack.c.h.b16 %v881
    %v946 = vunpack.c.l.b16 %v882
    %v947 = vunpack.c.h.b16 %v882
    %v948 = vunpack.c.l.b16 %v883
    %v949 = vunpack.c.h.b16 %v883
    %v950 = vunpack.c.l.b16 %v884
    %v951 = vunpack.c.h.b16 %v884
    %v952 = vunpack.c.l.b16 %v885
    %v953 = vunpack.c.h.b16 %v885
    %v954 = vunpack.c.l.b16 %v886
    %v955 = vunpack.c.h.b16 %v886
    %v956 = vunpack.c.l.b16 %v887
    %v957 = vunpack.c.h.b16 %v887
    %v958 = vunpack.c.l.b16 %v888
    %v959 = vunpack.c.h.b16 %v888
    %v960 = vunpack.c.l.b16 %v889
    %v961 = vunpack.c.h.b16 %v889
    %v962 = vunpack.c.l.b16 %v890
    %v963 = vunpack.c.h.b16 %v890
    %v964 = vunpack.c.l.b16 %v891
    %v965 = vunpack.c.h.b16 %v891
    %v966 = vunpack.c.l.b16 %v892
    %v967 = vunpack.c.h.b16 %v892
    %v968 = vunpack.c.l.b16 %v893
    %v969 = vunpack.c.h.b16 %v893
    %v970 = vunpack.c.l.b16 %v894
    %v971 = vunpack.c.h.b16 %v894
    %v972 = vpack.c.b16 %v926, %v924
    %v973 = vpack.c.b16 %v927, %v925
    %v974 = vpack.c.b16 %v930, %v928
    %v975 = vpack.c.b16 %v931, %v929
    %v976 = vpack.c.b16 %v934, %v932
    %v977 = vpack.c.b16 %v935, %v933
    %v978 = vpack.c.b16 %v938, %v936
    %v979 = vpack.c.b16 %v939, %v937
    %v980 = vpack.c.b16 %v942, %v940
    %v981 = vpack.c.b16 %v943, %v941
    %v982 = vpack.c.b16 %v946, %v944
    %v983 = vpack.c.b16 %v947, %v945
    %v984 = vpack.c.b16 %v950, %v948
    %v985 = vpack.c.b16 %v951, %v949
    %v986 = vpack.c.b16 %v954, %v952
    %v987 = vpack.c.b16 %v955, %v953
    %v988 = vpack.c.b16 %v958, %v956
    %v989 = vpack.c.b16 %v959, %v957
    %v990 = vpack.c.b16 %v962, %v960
    %v991 = vpack.c.b16 %v963, %v961
    %v992 = vpack.c.b16 %v966, %v964
    %v993 = vpack.c.b16 %v967, %v965
    %v994 = vpack.c.b16 %v970, %v968
    %v995 = vpack.c.b16 %v971, %v969
    %vm1020 = vcmask 523264
    %v1022 = vsel %vm1020, %v870, 0
    %1024 = vmatpush.bf16.msra.mxu0 %v986
    %1025 = vmatpush.bf16.msra.mxu0 %v984
    %1026 = vmatpush.bf16.msra.mxu0 %v982
    %1027 = vmatpush.bf16.msra.mxu0 %v980
    %1028 = vmatpush.bf16.msra.mxu0 %v978
    %1029 = vmatpush.bf16.msra.mxu0 %v976
    %1030 = vmatpush.bf16.msra.mxu0 %v974
    %1031 = vmatpush.bf16.msra.mxu0 %v972
    %1032 = vmatmul.bf16.gmra.mxu0 %v869
    %v1033 = vpop.f32.mrf.mxu0
    %v1034 = vadd.f32 %v896, %v1033
    %v1035 = vpop.f32.mrf.mxu0
    %1036 = vdwg.mxu0
    %1037 = vmatpush.bf16.msra.mxu0 0
    %1038 = vmatpush.bf16.msra.mxu0 0
    %1039 = vmatpush.bf16.msra.mxu0 0
    %1040 = vmatpush.bf16.msra.mxu0 0
    %1041 = vmatpush.bf16.msra.mxu0 %v994
    %1042 = vmatpush.bf16.msra.mxu0 %v992
    %1043 = vmatpush.bf16.msra.mxu0 %v990
    %1044 = vmatpush.bf16.msra.mxu0 %v988
    %1045 = vmatmul.bf16.gmra.mxu0 %v1022
    %v1046 = vpop.f32.mrf.mxu0
    %v1047 = vadd.f32 %v1034, %v1046
    %v1048 = vpop.f32.mrf.mxu0
    %1049 = vdwg.mxu0
    %1050 = vmatpush.bf16.msra.mxu0 %v987
    %1051 = vmatpush.bf16.msra.mxu0 %v985
    %1052 = vmatpush.bf16.msra.mxu0 %v983
    %1053 = vmatpush.bf16.msra.mxu0 %v981
    %1054 = vmatpush.bf16.msra.mxu0 %v979
    %1055 = vmatpush.bf16.msra.mxu0 %v977
    %1056 = vmatpush.bf16.msra.mxu0 %v975
    %1057 = vmatpush.bf16.msra.mxu0 %v973
    %1058 = vmatmul.bf16.gmra.mxu0 %v869
    %v1059 = vpop.f32.mrf.mxu0
    %v1060 = vadd.f32 %v897, %v1059
    %v1061 = vpop.f32.mrf.mxu0
    %1062 = vdwg.mxu0
    %1063 = vmatpush.bf16.msra.mxu0 0
    %1064 = vmatpush.bf16.msra.mxu0 0
    %1065 = vmatpush.bf16.msra.mxu0 0
    %1066 = vmatpush.bf16.msra.mxu0 0
    %1067 = vmatpush.bf16.msra.mxu0 %v995
    %1068 = vmatpush.bf16.msra.mxu0 %v993
    %1069 = vmatpush.bf16.msra.mxu0 %v991
    %1070 = vmatpush.bf16.msra.mxu0 %v989
    %1071 = vmatmul.bf16.gmra.mxu0 %v1022
    %v1072 = vpop.f32.mrf.mxu0
    %v1073 = vadd.f32 %v1060, %v1072
    %v1074 = vpop.f32.mrf.mxu0
    %1075 = vdwg.mxu0
    %v1076 = vmul.f32 %v1047, %v581
    %v1077 = vmul.f32 %v1073, %v582
    %v1078 = vtanh.pop %v1076
    %v1079 = vtanh.pop %v1077
    %v1080 = vsub.f32 %v1078, 1.0
    %v1081 = vsub.f32 %v1079, 1.0
    %v1082 = vmul.f32 %v581, %v1080
    %v1083 = vmul.f32 %v582, %v1081
    %v1084 = vadd.f32 %v1082, 1.0
    %v1085 = vadd.f32 %v1083, 1.0
    %v1086 = vmul.f32 %v1084, 0.0
    %v1087 = vmul.f32 %v1084, %v1085
    %1089 = vrot.lane.b32.xlu0 %v1087, 64
    %v1090 = vpop.permute.xlu0 %1089
    %v1092 = vadd.f32 %v1086, %v1090
    %v1093 = vtanh.pop %v1092
    %v1094 = vmul.f32 %v1085, %v1093
    %s1095 = scalar_lea.vmem [#allocation4], 32
    %v1096 = vld [vmem:[%s1095] sm:$0xff]
    %v1097 = vld [vmem:[%s1095 + $0x8] sm:$0xff]
    %v1098 = vld [vmem:[%s1095 + $0x10] sm:$0xff]
    %v1099 = vld [vmem:[%s1095 + $0x18] sm:$0xff]
    %1100 = vmatpush.bf16.msra.mxu0 %v752
    %1101 = vmatpush.bf16.msra.mxu0 %v748
    %1102 = vmatpush.bf16.msra.mxu0 %v744
    %1103 = vmatpush.bf16.msra.mxu0 %v740
    %1104 = vmatpush.bf16.msra.mxu0 %v736
    %1105 = vmatpush.bf16.msra.mxu0 %v732
    %1106 = vmatpush.bf16.msra.mxu0 %v728
    %1107 = vmatpush.bf16.msra.mxu0 %v724
    %1108 = vmatmul.bf16.gmra.mxu0 %v869
    %v1109 = vpop.f32.mrf.mxu0
    %v1110 = vadd.f32 0.0, %v1109
    %v1111 = vpop.f32.mrf.mxu0
    %1112 = vdwg.mxu0
    %1113 = vmatpush.bf16.msra.mxu0 %v753
    %1114 = vmatpush.bf16.msra.mxu0 %v749
    %1115 = vmatpush.bf16.msra.mxu0 %v745
    %1116 = vmatpush.bf16.msra.mxu0 %v741
    %1117 = vmatpush.bf16.msra.mxu0 %v737
    %1118 = vmatpush.bf16.msra.mxu0 %v733
    %1119 = vmatpush.bf16.msra.mxu0 %v729
    %1120 = vmatpush.bf16.msra.mxu0 %v725
    %1121 = vmatmul.bf16.gmra.mxu0 %v869
    %v1122 = vpop.f32.mrf.mxu0
    %v1123 = vadd.f32 0.0, %v1122
    %v1124 = vpop.f32.mrf.mxu0
    %1125 = vdwg.mxu0
    %1126 = vmatpush.bf16.msra.mxu0 %v754
    %1127 = vmatpush.bf16.msra.mxu0 %v750
    %1128 = vmatpush.bf16.msra.mxu0 %v746
    %1129 = vmatpush.bf16.msra.mxu0 %v742
    %1130 = vmatpush.bf16.msra.mxu0 %v738
    %1131 = vmatpush.bf16.msra.mxu0 %v734
    %1132 = vmatpush.bf16.msra.mxu0 %v730
    %1133 = vmatpush.bf16.msra.mxu0 %v726
    %1134 = vmatmul.bf16.gmra.mxu0 %v869
    %v1135 = vpop.f32.mrf.mxu0
    %v1136 = vadd.f32 0.0, %v1135
    %v1137 = vpop.f32.mrf.mxu0
    %1138 = vdwg.mxu0
    %1139 = vmatpush.bf16.msra.mxu0 %v755
    %1140 = vmatpush.bf16.msra.mxu0 %v751
    %1141 = vmatpush.bf16.msra.mxu0 %v747
    %1142 = vmatpush.bf16.msra.mxu0 %v743
    %1143 = vmatpush.bf16.msra.mxu0 %v739
    %1144 = vmatpush.bf16.msra.mxu0 %v735
    %1145 = vmatpush.bf16.msra.mxu0 %v731
    %1146 = vmatpush.bf16.msra.mxu0 %v727
    %1147 = vmatmul.bf16.gmra.mxu0 %v869
    %v1148 = vpop.f32.mrf.mxu0
    %v1149 = vadd.f32 0.0, %v1148
    %v1150 = vpop.f32.mrf.mxu0
    %1151 = vdwg.mxu0
    %v1152 = vadd.f32 %v1096, %v1110
    %v1153 = vadd.f32 %v1097, %v1123
    %v1154 = vadd.f32 %v1098, %v1136
    %v1155 = vadd.f32 %v1099, %v1149
    %v1156 = vmul.f32 %v1152, %v571
    %v1157 = vmul.f32 %v1153, %v572
    %v1158 = vmul.f32 %v1154, %v573
    %v1159 = vmul.f32 %v1155, %v574
    %v1160 = vtanh.pop %v1156
    %v1161 = vtanh.pop %v1157
    %v1162 = vtanh.pop %v1158
    %v1163 = vtanh.pop %v1159
    %v1164 = vsub.f32 %v1160, 1.0
    %v1165 = vsub.f32 %v1161, 1.0
    %v1166 = vsub.f32 %v1162, 1.0
    %v1167 = vsub.f32 %v1163, 1.0
    %v1168 = vmul.f32 %v571, %v1164
    %v1169 = vmul.f32 %v572, %v1165
    %v1170 = vmul.f32 %v573, %v1166
    %v1171 = vmul.f32 %v574, %v1167
    %v1172 = vadd.f32 %v1168, 1.0
    %v1173 = vadd.f32 %v1169, 1.0
    %v1174 = vadd.f32 %v1170, 1.0
    %v1175 = vadd.f32 %v1171, 1.0
    %v1176 = vmul.f32 %v1173, %v866
    %v1177 = vmul.f32 %v1172, %v1174
    %v1178 = vadd.f32 %v1176, %v1177
    %v1179 = vtanh.pop %v1178
    %v1180 = vmul.f32 %v1175, %v1179
    %1182 = vrot.lane.b32.xlu0 %v1094, 64
    %v1183 = vpop.permute.xlu0 %1182
    %v1185 = vpack.c.bf16 %v1180, %v1180
    %v1186 = vpack.c.bf16 %v1183, %v1183
    %v1188 = vsel %vm1020, %v1186, 0
    %1190 = vmatpush.bf16.msra.mxu0 %v986
    %1191 = vmatpush.bf16.msra.mxu0 %v984
    %1192 = vmatpush.bf16.msra.mxu0 %v982
    %1193 = vmatpush.bf16.msra.mxu0 %v980
    %1194 = vmatpush.bf16.msra.mxu0 %v978
    %1195 = vmatpush.bf16.msra.mxu0 %v976
    %1196 = vmatpush.bf16.msra.mxu0 %v974
    %1197 = vmatpush.bf16.msra.mxu0 %v972
    %1198 = vmatmul.bf16.gmra.mxu0 %v1185
    %v1199 = vpop.f32.mrf.mxu0
    %v1200 = vadd.f32 %v896, %v1199
    %v1201 = vpop.f32.mrf.mxu0
    %1202 = vdwg.mxu0
    %1203 = vmatpush.bf16.msra.mxu0 0
    %1204 = vmatpush.bf16.msra.mxu0 0
    %1205 = vmatpush.bf16.msra.mxu0 0
    %1206 = vmatpush.bf16.msra.mxu0 0
    %1207 = vmatpush.bf16.msra.mxu0 %v994
    %1208 = vmatpush.bf16.msra.mxu0 %v992
    %1209 = vmatpush.bf16.msra.mxu0 %v990
    %1210 = vmatpush.bf16.msra.mxu0 %v988
    %1211 = vmatmul.bf16.gmra.mxu0 %v1188
    %v1212 = vpop.f32.mrf.mxu0
    %v1213 = vadd.f32 %v1200, %v1212
    %v1214 = vpop.f32.mrf.mxu0
    %1215 = vdwg.mxu0
    %1216 = vmatpush.bf16.msra.mxu0 %v987
    %1217 = vmatpush.bf16.msra.mxu0 %v985
    %1218 = vmatpush.bf16.msra.mxu0 %v983
    %1219 = vmatpush.bf16.msra.mxu0 %v981
    %1220 = vmatpush.bf16.msra.mxu0 %v979
    %1221 = vmatpush.bf16.msra.mxu0 %v977
    %1222 = vmatpush.bf16.msra.mxu0 %v975
    %1223 = vmatpush.bf16.msra.mxu0 %v973
    %1224 = vmatmul.bf16.gmra.mxu0 %v1185
    %v1225 = vpop.f32.mrf.mxu0
    %v1226 = vadd.f32 %v897, %v1225
    %v1227 = vpop.f32.mrf.mxu0
    %1228 = vdwg.mxu0
    %1229 = vmatpush.bf16.msra.mxu0 0
    %1230 = vmatpush.bf16.msra.mxu0 0
    %1231 = vmatpush.bf16.msra.mxu0 0
    %1232 = vmatpush.bf16.msra.mxu0 0
    %1233 = vmatpush.bf16.msra.mxu0 %v995
    %1234 = vmatpush.bf16.msra.mxu0 %v993
    %1235 = vmatpush.bf16.msra.mxu0 %v991
    %1236 = vmatpush.bf16.msra.mxu0 %v989
    %1237 = vmatmul.bf16.gmra.mxu0 %v1188
    %v1238 = vpop.f32.mrf.mxu0
    %v1239 = vadd.f32 %v1226, %v1238
    %v1240 = vpop.f32.mrf.mxu0
    %1241 = vdwg.mxu0
    %v1242 = vmul.f32 %v1213, %v581
    %v1243 = vmul.f32 %v1239, %v582
    %v1244 = vtanh.pop %v1242
    %v1245 = vtanh.pop %v1243
    %v1246 = vsub.f32 %v1244, 1.0
    %v1247 = vsub.f32 %v1245, 1.0
    %v1248 = vmul.f32 %v581, %v1246
    %v1249 = vmul.f32 %v582, %v1247
    %v1250 = vadd.f32 %v1248, 1.0
    %v1251 = vadd.f32 %v1249, 1.0
    %v1252 = vmul.f32 %v1250, %v1092
    %v1253 = vmul.f32 %v1250, %v1251
    %1255 = vrot.lane.b32.xlu0 %v1253, 64
    %v1256 = vpop.permute.xlu0 %1255
    %v1258 = vadd.f32 %v1252, %v1256
    %v1259 = vtanh.pop %v1258
    %v1260 = vmul.f32 %v1251, %v1259
    %s1261 = scalar_lea.vmem [#allocation4], 64
    %v1262 = vld [vmem:[%s1261] sm:$0xff]
    %v1263 = vld [vmem:[%s1261 + $0x8] sm:$0xff]
    %v1264 = vld [vmem:[%s1261 + $0x10] sm:$0xff]
    %v1265 = vld [vmem:[%s1261 + $0x18] sm:$0xff]
    %1266 = vmatpush.bf16.msra.mxu0 %v752
    %1267 = vmatpush.bf16.msra.mxu0 %v748
    %1268 = vmatpush.bf16.msra.mxu0 %v744
    %1269 = vmatpush.bf16.msra.mxu0 %v740
    %1270 = vmatpush.bf16.msra.mxu0 %v736
    %1271 = vmatpush.bf16.msra.mxu0 %v732
    %1272 = vmatpush.bf16.msra.mxu0 %v728
    %1273 = vmatpush.bf16.msra.mxu0 %v724
    %1274 = vmatmul.bf16.gmra.mxu0 %v1185
    %v1275 = vpop.f32.mrf.mxu0
    %v1276 = vadd.f32 0.0, %v1275
    %v1277 = vpop.f32.mrf.mxu0
    %1278 = vdwg.mxu0
    %1279 = vmatpush.bf16.msra.mxu0 %v753
    %1280 = vmatpush.bf16.msra.mxu0 %v749
    %1281 = vmatpush.bf16.msra.mxu0 %v745
    %1282 = vmatpush.bf16.msra.mxu0 %v741
    %1283 = vmatpush.bf16.msra.mxu0 %v737
    %1284 = vmatpush.bf16.msra.mxu0 %v733
    %1285 = vmatpush.bf16.msra.mxu0 %v729
    %1286 = vmatpush.bf16.msra.mxu0 %v725
    %1287 = vmatmul.bf16.gmra.mxu0 %v1185
    %v1288 = vpop.f32.mrf.mxu0
    %v1289 = vadd.f32 0.0, %v1288
    %v1290 = vpop.f32.mrf.mxu0
    %1291 = vdwg.mxu0
    %1292 = vmatpush.bf16.msra.mxu0 %v754
    %1293 = vmatpush.bf16.msra.mxu0 %v750
    %1294 = vmatpush.bf16.msra.mxu0 %v746
    %1295 = vmatpush.bf16.msra.mxu0 %v742
    %1296 = vmatpush.bf16.msra.mxu0 %v738
    %1297 = vmatpush.bf16.msra.mxu0 %v734
    %1298 = vmatpush.bf16.msra.mxu0 %v730
    %1299 = vmatpush.bf16.msra.mxu0 %v726
    %1300 = vmatmul.bf16.gmra.mxu0 %v1185
    %v1301 = vpop.f32.mrf.mxu0
    %v1302 = vadd.f32 0.0, %v1301
    %v1303 = vpop.f32.mrf.mxu0
    %1304 = vdwg.mxu0
    %1305 = vmatpush.bf16.msra.mxu0 %v755
    %1306 = vmatpush.bf16.msra.mxu0 %v751
    %1307 = vmatpush.bf16.msra.mxu0 %v747
    %1308 = vmatpush.bf16.msra.mxu0 %v743
    %1309 = vmatpush.bf16.msra.mxu0 %v739
    %1310 = vmatpush.bf16.msra.mxu0 %v735
    %1311 = vmatpush.bf16.msra.mxu0 %v731
    %1312 = vmatpush.bf16.msra.mxu0 %v727
    %1313 = vmatmul.bf16.gmra.mxu0 %v1185
    %v1314 = vpop.f32.mrf.mxu0
    %v1315 = vadd.f32 0.0, %v1314
    %v1316 = vpop.f32.mrf.mxu0
    %1317 = vdwg.mxu0
    %v1318 = vadd.f32 %v1262, %v1276
    %v1319 = vadd.f32 %v1263, %v1289
    %v1320 = vadd.f32 %v1264, %v1302
    %v1321 = vadd.f32 %v1265, %v1315
    %v1322 = vmul.f32 %v1318, %v571
    %v1323 = vmul.f32 %v1319, %v572
    %v1324 = vmul.f32 %v1320, %v573
    %v1325 = vmul.f32 %v1321, %v574
    %v1326 = vtanh.pop %v1322
    %v1327 = vtanh.pop %v1323
    %v1328 = vtanh.pop %v1324
    %v1329 = vtanh.pop %v1325
    %v1330 = vsub.f32 %v1326, 1.0
    %v1331 = vsub.f32 %v1327, 1.0
    %v1332 = vsub.f32 %v1328, 1.0
    %v1333 = vsub.f32 %v1329, 1.0
    %v1334 = vmul.f32 %v571, %v1330
    %v1335 = vmul.f32 %v572, %v1331
    %v1336 = vmul.f32 %v573, %v1332
    %v1337 = vmul.f32 %v574, %v1333
    %v1338 = vadd.f32 %v1334, 1.0
    %v1339 = vadd.f32 %v1335, 1.0
    %v1340 = vadd.f32 %v1336, 1.0
    %v1341 = vadd.f32 %v1337, 1.0
    %v1342 = vmul.f32 %v1339, %v1178
    %v1343 = vmul.f32 %v1338, %v1340
    %v1344 = vadd.f32 %v1342, %v1343
    %v1345 = vtanh.pop %v1344
    %v1346 = vmul.f32 %v1341, %v1345
    %1348 = vrot.lane.b32.xlu0 %v1260, 64
    %v1349 = vpop.permute.xlu0 %1348
    %v1351 = vpack.c.bf16 %v1346, %v1346
    %v1352 = vpack.c.bf16 %v1349, %v1349
    %v1354 = vsel %vm1020, %v1352, 0
    %1356 = vmatpush.bf16.msra.mxu0 %v986
    %1357 = vmatpush.bf16.msra.mxu0 %v984
    %1358 = vmatpush.bf16.msra.mxu0 %v982
    %1359 = vmatpush.bf16.msra.mxu0 %v980
    %1360 = vmatpush.bf16.msra.mxu0 %v978
    %1361 = vmatpush.bf16.msra.mxu0 %v976
    %1362 = vmatpush.bf16.msra.mxu0 %v974
    %1363 = vmatpush.bf16.msra.mxu0 %v972
    %1364 = vmatmul.bf16.gmra.mxu0 %v1351
    %v1365 = vpop.f32.mrf.mxu0
    %v1366 = vadd.f32 %v896, %v1365
    %v1367 = vpop.f32.mrf.mxu0
    %1368 = vdwg.mxu0
    %1369 = vmatpush.bf16.msra.mxu0 0
    %1370 = vmatpush.bf16.msra.mxu0 0
    %1371 = vmatpush.bf16.msra.mxu0 0
    %1372 = vmatpush.bf16.msra.mxu0 0
    %1373 = vmatpush.bf16.msra.mxu0 %v994
    %1374 = vmatpush.bf16.msra.mxu0 %v992
    %1375 = vmatpush.bf16.msra.mxu0 %v990
    %1376 = vmatpush.bf16.msra.mxu0 %v988
    %1377 = vmatmul.bf16.gmra.mxu0 %v1354
    %v1378 = vpop.f32.mrf.mxu0
    %v1379 = vadd.f32 %v1366, %v1378
    %v1380 = vpop.f32.mrf.mxu0
    %1381 = vdwg.mxu0
    %1382 = vmatpush.bf16.msra.mxu0 %v987
    %1383 = vmatpush.bf16.msra.mxu0 %v985
    %1384 = vmatpush.bf16.msra.mxu0 %v983
    %1385 = vmatpush.bf16.msra.mxu0 %v981
    %1386 = vmatpush.bf16.msra.mxu0 %v979
    %1387 = vmatpush.bf16.msra.mxu0 %v977
    %1388 = vmatpush.bf16.msra.mxu0 %v975
    %1389 = vmatpush.bf16.msra.mxu0 %v973
    %1390 = vmatmul.bf16.gmra.mxu0 %v1351
    %v1391 = vpop.f32.mrf.mxu0
    %v1392 = vadd.f32 %v897, %v1391
    %v1393 = vpop.f32.mrf.mxu0
    %1394 = vdwg.mxu0
    %1395 = vmatpush.bf16.msra.mxu0 0
    %1396 = vmatpush.bf16.msra.mxu0 0
    %1397 = vmatpush.bf16.msra.mxu0 0
    %1398 = vmatpush.bf16.msra.mxu0 0
    %1399 = vmatpush.bf16.msra.mxu0 %v995
    %1400 = vmatpush.bf16.msra.mxu0 %v993
    %1401 = vmatpush.bf16.msra.mxu0 %v991
    %1402 = vmatpush.bf16.msra.mxu0 %v989
    %1403 = vmatmul.bf16.gmra.mxu0 %v1354
    %v1404 = vpop.f32.mrf.mxu0
    %v1405 = vadd.f32 %v1392, %v1404
    %v1406 = vpop.f32.mrf.mxu0
    %1407 = vdwg.mxu0
    %v1408 = vmul.f32 %v1379, %v581
    %v1409 = vmul.f32 %v1405, %v582
    %v1410 = vtanh.pop %v1408
    %v1411 = vtanh.pop %v1409
    %v1412 = vsub.f32 %v1410, 1.0
    %v1413 = vsub.f32 %v1411, 1.0
    %v1414 = vmul.f32 %v581, %v1412
    %v1415 = vmul.f32 %v582, %v1413
    %v1416 = vadd.f32 %v1414, 1.0
    %v1417 = vadd.f32 %v1415, 1.0
    %v1418 = vmul.f32 %v1416, %v1258
    %v1419 = vmul.f32 %v1416, %v1417
    %1421 = vrot.lane.b32.xlu0 %v1419, 64
    %v1422 = vpop.permute.xlu0 %1421
    %v1424 = vadd.f32 %v1418, %v1422
    %v1425 = vtanh.pop %v1424
    %v1426 = vmul.f32 %v1417, %v1425
    %s1427 = scalar_lea.vmem [#allocation4], 96
    %v1428 = vld [vmem:[%s1427] sm:$0xff]
    %v1429 = vld [vmem:[%s1427 + $0x8] sm:$0xff]
    %v1430 = vld [vmem:[%s1427 + $0x10] sm:$0xff]
    %v1431 = vld [vmem:[%s1427 + $0x18] sm:$0xff]
    %1432 = vmatpush.bf16.msra.mxu0 %v752
    %1433 = vmatpush.bf16.msra.mxu0 %v748
    %1434 = vmatpush.bf16.msra.mxu0 %v744
    %1435 = vmatpush.bf16.msra.mxu0 %v740
    %1436 = vmatpush.bf16.msra.mxu0 %v736
    %1437 = vmatpush.bf16.msra.mxu0 %v732
    %1438 = vmatpush.bf16.msra.mxu0 %v728
    %1439 = vmatpush.bf16.msra.mxu0 %v724
    %1440 = vmatmul.bf16.gmra.mxu0 %v1351
    %v1441 = vpop.f32.mrf.mxu0
    %v1442 = vadd.f32 0.0, %v1441
    %v1443 = vpop.f32.mrf.mxu0
    %1444 = vdwg.mxu0
    %1445 = vmatpush.bf16.msra.mxu0 %v753
    %1446 = vmatpush.bf16.msra.mxu0 %v749
    %1447 = vmatpush.bf16.msra.mxu0 %v745
    %1448 = vmatpush.bf16.msra.mxu0 %v741
    %1449 = vmatpush.bf16.msra.mxu0 %v737
    %1450 = vmatpush.bf16.msra.mxu0 %v733
    %1451 = vmatpush.bf16.msra.mxu0 %v729
    %1452 = vmatpush.bf16.msra.mxu0 %v725
    %1453 = vmatmul.bf16.gmra.mxu0 %v1351
    %v1454 = vpop.f32.mrf.mxu0
    %v1455 = vadd.f32 0.0, %v1454
    %v1456 = vpop.f32.mrf.mxu0
    %1457 = vdwg.mxu0
    %1458 = vmatpush.bf16.msra.mxu0 %v754
    %1459 = vmatpush.bf16.msra.mxu0 %v750
    %1460 = vmatpush.bf16.msra.mxu0 %v746
    %1461 = vmatpush.bf16.msra.mxu0 %v742
    %1462 = vmatpush.bf16.msra.mxu0 %v738
    %1463 = vmatpush.bf16.msra.mxu0 %v734
    %1464 = vmatpush.bf16.msra.mxu0 %v730
    %1465 = vmatpush.bf16.msra.mxu0 %v726
    %1466 = vmatmul.bf16.gmra.mxu0 %v1351
    %v1467 = vpop.f32.mrf.mxu0
    %v1468 = vadd.f32 0.0, %v1467
    %v1469 = vpop.f32.mrf.mxu0
    %1470 = vdwg.mxu0
    %1471 = vmatpush.bf16.msra.mxu0 %v755
    %1472 = vmatpush.bf16.msra.mxu0 %v751
    %1473 = vmatpush.bf16.msra.mxu0 %v747
    %1474 = vmatpush.bf16.msra.mxu0 %v743
    %1475 = vmatpush.bf16.msra.mxu0 %v739
    %1476 = vmatpush.bf16.msra.mxu0 %v735
    %1477 = vmatpush.bf16.msra.mxu0 %v731
    %1478 = vmatpush.bf16.msra.mxu0 %v727
    %1479 = vmatmul.bf16.gmra.mxu0 %v1351
    %v1480 = vpop.f32.mrf.mxu0
    %v1481 = vadd.f32 0.0, %v1480
    %v1482 = vpop.f32.mrf.mxu0
    %1483 = vdwg.mxu0
    %v1484 = vadd.f32 %v1428, %v1442
    %v1485 = vadd.f32 %v1429, %v1455
    %v1486 = vadd.f32 %v1430, %v1468
    %v1487 = vadd.f32 %v1431, %v1481
    %v1488 = vmul.f32 %v1484, %v571
    %v1489 = vmul.f32 %v1485, %v572
    %v1490 = vmul.f32 %v1486, %v573
    %v1491 = vmul.f32 %v1487, %v574
    %v1492 = vtanh.pop %v1488
    %v1493 = vtanh.pop %v1489
    %v1494 = vtanh.pop %v1490
    %v1495 = vtanh.pop %v1491
    %v1496 = vsub.f32 %v1492, 1.0
    %v1497 = vsub.f32 %v1493, 1.0
    %v1498 = vsub.f32 %v1494, 1.0
    %v1499 = vsub.f32 %v1495, 1.0
    %v1500 = vmul.f32 %v571, %v1496
    %v1501 = vmul.f32 %v572, %v1497
    %v1502 = vmul.f32 %v573, %v1498
    %v1503 = vmul.f32 %v574, %v1499
    %v1504 = vadd.f32 %v1500, 1.0
    %v1505 = vadd.f32 %v1501, 1.0
    %v1506 = vadd.f32 %v1502, 1.0
    %v1507 = vadd.f32 %v1503, 1.0
    %v1508 = vmul.f32 %v1505, %v1344
    %v1509 = vmul.f32 %v1504, %v1506
    %v1510 = vadd.f32 %v1508, %v1509
    %v1511 = vtanh.pop %v1510
    %v1512 = vmul.f32 %v1507, %v1511
    %1514 = vrot.lane.b32.xlu0 %v1426, 64
    %v1515 = vpop.permute.xlu0 %1514
    %v1517 = vpack.c.bf16 %v1512, %v1512
    %v1518 = vpack.c.bf16 %v1515, %v1515
    %v1520 = vsel %vm1020, %v1518, 0
    %1522 = vmatpush.bf16.msra.mxu0 %v986
    %1523 = vmatpush.bf16.msra.mxu0 %v984
    %1524 = vmatpush.bf16.msra.mxu0 %v982
    %1525 = vmatpush.bf16.msra.mxu0 %v980
    %1526 = vmatpush.bf16.msra.mxu0 %v978
    %1527 = vmatpush.bf16.msra.mxu0 %v976
    %1528 = vmatpush.bf16.msra.mxu0 %v974
    %1529 = vmatpush.bf16.msra.mxu0 %v972
    %1530 = vmatmul.bf16.gmra.mxu0 %v1517
    %v1531 = vpop.f32.mrf.mxu0
    %v1532 = vadd.f32 %v896, %v1531
    %v1533 = vpop.f32.mrf.mxu0
    %1534 = vdwg.mxu0
    %1535 = vmatpush.bf16.msra.mxu0 0
    %1536 = vmatpush.bf16.msra.mxu0 0
    %1537 = vmatpush.bf16.msra.mxu0 0
    %1538 = vmatpush.bf16.msra.mxu0 0
    %1539 = vmatpush.bf16.msra.mxu0 %v994
    %1540 = vmatpush.bf16.msra.mxu0 %v992
    %1541 = vmatpush.bf16.msra.mxu0 %v990
    %1542 = vmatpush.bf16.msra.mxu0 %v988
    %1543 = vmatmul.bf16.gmra.mxu0 %v1520
    %v1544 = vpop.f32.mrf.mxu0
    %v1545 = vadd.f32 %v1532, %v1544
    %v1546 = vpop.f32.mrf.mxu0
    %1547 = vdwg.mxu0
    %1548 = vmatpush.bf16.msra.mxu0 %v987
    %1549 = vmatpush.bf16.msra.mxu0 %v985
    %1550 = vmatpush.bf16.msra.mxu0 %v983
    %1551 = vmatpush.bf16.msra.mxu0 %v981
    %1552 = vmatpush.bf16.msra.mxu0 %v979
    %1553 = vmatpush.bf16.msra.mxu0 %v977
    %1554 = vmatpush.bf16.msra.mxu0 %v975
    %1555 = vmatpush.bf16.msra.mxu0 %v973
    %1556 = vmatmul.bf16.gmra.mxu0 %v1517
    %v1557 = vpop.f32.mrf.mxu0
    %v1558 = vadd.f32 %v897, %v1557
    %v1559 = vpop.f32.mrf.mxu0
    %1560 = vdwg.mxu0
    %1561 = vmatpush.bf16.msra.mxu0 0
    %1562 = vmatpush.bf16.msra.mxu0 0
    %1563 = vmatpush.bf16.msra.mxu0 0
    %1564 = vmatpush.bf16.msra.mxu0 0
    %1565 = vmatpush.bf16.msra.mxu0 %v995
    %1566 = vmatpush.bf16.msra.mxu0 %v993
    %1567 = vmatpush.bf16.msra.mxu0 %v991
    %1568 = vmatpush.bf16.msra.mxu0 %v989
    %1569 = vmatmul.bf16.gmra.mxu0 %v1520
    %v1570 = vpop.f32.mrf.mxu0
    %v1571 = vadd.f32 %v1558, %v1570
    %v1572 = vpop.f32.mrf.mxu0
    %1573 = vdwg.mxu0
    %v1574 = vmul.f32 %v1545, %v581
    %v1575 = vmul.f32 %v1571, %v582
    %v1576 = vtanh.pop %v1574
    %v1577 = vtanh.pop %v1575
    %v1578 = vsub.f32 %v1576, 1.0
    %v1579 = vsub.f32 %v1577, 1.0
    %v1580 = vmul.f32 %v581, %v1578
    %v1581 = vmul.f32 %v582, %v1579
    %v1582 = vadd.f32 %v1580, 1.0
    %v1583 = vadd.f32 %v1581, 1.0
    %v1584 = vmul.f32 %v1582, %v1424
    %v1585 = vmul.f32 %v1582, %v1583
    %1587 = vrot.lane.b32.xlu0 %v1585, 64
    %v1588 = vpop.permute.xlu0 %1587
    %v1590 = vadd.f32 %v1584, %v1588
    %v1591 = vtanh.pop %v1590
    %v1592 = vmul.f32 %v1583, %v1591
    %s1593 = scalar_lea.vmem [#allocation4], 128
    %v1594 = vld [vmem:[%s1593] sm:$0xff]
    %v1595 = vld [vmem:[%s1593 + $0x8] sm:$0xff]
    %v1596 = vld [vmem:[%s1593 + $0x10] sm:$0xff]
    %v1597 = vld [vmem:[%s1593 + $0x18] sm:$0xff]
    %1598 = vmatpush.bf16.msra.mxu0 %v752
    %1599 = vmatpush.bf16.msra.mxu0 %v748
    %1600 = vmatpush.bf16.msra.mxu0 %v744
    %1601 = vmatpush.bf16.msra.mxu0 %v740
    %1602 = vmatpush.bf16.msra.mxu0 %v736
    %1603 = vmatpush.bf16.msra.mxu0 %v732
    %1604 = vmatpush.bf16.msra.mxu0 %v728
    %1605 = vmatpush.bf16.msra.mxu0 %v724
    %1606 = vmatmul.bf16.gmra.mxu0 %v1517
    %v1607 = vpop.f32.mrf.mxu0
    %v1608 = vadd.f32 0.0, %v1607
    %v1609 = vpop.f32.mrf.mxu0
    %1610 = vdwg.mxu0
    %1611 = vmatpush.bf16.msra.mxu0 %v753
    %1612 = vmatpush.bf16.msra.mxu0 %v749
    %1613 = vmatpush.bf16.msra.mxu0 %v745
    %1614 = vmatpush.bf16.msra.mxu0 %v741
    %1615 = vmatpush.bf16.msra.mxu0 %v737
    %1616 = vmatpush.bf16.msra.mxu0 %v733
    %1617 = vmatpush.bf16.msra.mxu0 %v729
    %1618 = vmatpush.bf16.msra.mxu0 %v725
    %1619 = vmatmul.bf16.gmra.mxu0 %v1517
    %v1620 = vpop.f32.mrf.mxu0
    %v1621 = vadd.f32 0.0, %v1620
    %v1622 = vpop.f32.mrf.mxu0
    %1623 = vdwg.mxu0
    %1624 = vmatpush.bf16.msra.mxu0 %v754
    %1625 = vmatpush.bf16.msra.mxu0 %v750
    %1626 = vmatpush.bf16.msra.mxu0 %v746
    %1627 = vmatpush.bf16.msra.mxu0 %v742
    %1628 = vmatpush.bf16.msra.mxu0 %v738
    %1629 = vmatpush.bf16.msra.mxu0 %v734
    %1630 = vmatpush.bf16.msra.mxu0 %v730
    %1631 = vmatpush.bf16.msra.mxu0 %v726
    %1632 = vmatmul.bf16.gmra.mxu0 %v1517
    %v1633 = vpop.f32.mrf.mxu0
    %v1634 = vadd.f32 0.0, %v1633
    %v1635 = vpop.f32.mrf.mxu0
    %1636 = vdwg.mxu0
    %1637 = vmatpush.bf16.msra.mxu0 %v755
    %1638 = vmatpush.bf16.msra.mxu0 %v751
    %1639 = vmatpush.bf16.msra.mxu0 %v747
    %1640 = vmatpush.bf16.msra.mxu0 %v743
    %1641 = vmatpush.bf16.msra.mxu0 %v739
    %1642 = vmatpush.bf16.msra.mxu0 %v735
    %1643 = vmatpush.bf16.msra.mxu0 %v731
    %1644 = vmatpush.bf16.msra.mxu0 %v727
    %1645 = vmatmul.bf16.gmra.mxu0 %v1517
    %v1646 = vpop.f32.mrf.mxu0
    %v1647 = vadd.f32 0.0, %v1646
    %v1648 = vpop.f32.mrf.mxu0
    %1649 = vdwg.mxu0
    %v1650 = vadd.f32 %v1594, %v1608
    %v1651 = vadd.f32 %v1595, %v1621
    %v1652 = vadd.f32 %v1596, %v1634
    %v1653 = vadd.f32 %v1597, %v1647
    %v1654 = vmul.f32 %v1650, %v571
    %v1655 = vmul.f32 %v1651, %v572
    %v1656 = vmul.f32 %v1652, %v573
    %v1657 = vmul.f32 %v1653, %v574
    %v1658 = vtanh.pop %v1654
    %v1659 = vtanh.pop %v1655
    %v1660 = vtanh.pop %v1656
    %v1661 = vtanh.pop %v1657
    %v1662 = vsub.f32 %v1658, 1.0
    %v1663 = vsub.f32 %v1659, 1.0
    %v1664 = vsub.f32 %v1660, 1.0
    %v1665 = vsub.f32 %v1661, 1.0
    %v1666 = vmul.f32 %v571, %v1662
    %v1667 = vmul.f32 %v572, %v1663
    %v1668 = vmul.f32 %v573, %v1664
    %v1669 = vmul.f32 %v574, %v1665
    %v1670 = vadd.f32 %v1666, 1.0
    %v1671 = vadd.f32 %v1667, 1.0
    %v1672 = vadd.f32 %v1668, 1.0
    %v1673 = vadd.f32 %v1669, 1.0
    %v1674 = vmul.f32 %v1671, %v1510
    %v1675 = vmul.f32 %v1670, %v1672
    %v1676 = vadd.f32 %v1674, %v1675
    %v1677 = vtanh.pop %v1676
    %v1678 = vmul.f32 %v1673, %v1677
    %1680 = vrot.lane.b32.xlu0 %v1592, 64
    %v1681 = vpop.permute.xlu0 %1680
    %v1683 = vpack.c.bf16 %v1678, %v1678
    %v1684 = vpack.c.bf16 %v1681, %v1681
    %v1686 = vsel %vm1020, %v1684, 0
    %1688 = vmatpush.bf16.msra.mxu0 %v986
    %1689 = vmatpush.bf16.msra.mxu0 %v984
    %1690 = vmatpush.bf16.msra.mxu0 %v982
    %1691 = vmatpush.bf16.msra.mxu0 %v980
    %1692 = vmatpush.bf16.msra.mxu0 %v978
    %1693 = vmatpush.bf16.msra.mxu0 %v976
    %1694 = vmatpush.bf16.msra.mxu0 %v974
    %1695 = vmatpush.bf16.msra.mxu0 %v972
    %1696 = vmatmul.bf16.gmra.mxu0 %v1683
    %v1697 = vpop.f32.mrf.mxu0
    %v1698 = vadd.f32 %v896, %v1697
    %v1699 = vpop.f32.mrf.mxu0
    %1700 = vdwg.mxu0
    %1701 = vmatpush.bf16.msra.mxu0 0
    %1702 = vmatpush.bf16.msra.mxu0 0
    %1703 = vmatpush.bf16.msra.mxu0 0
    %1704 = vmatpush.bf16.msra.mxu0 0
    %1705 = vmatpush.bf16.msra.mxu0 %v994
    %1706 = vmatpush.bf16.msra.mxu0 %v992
    %1707 = vmatpush.bf16.msra.mxu0 %v990
    %1708 = vmatpush.bf16.msra.mxu0 %v988
    %1709 = vmatmul.bf16.gmra.mxu0 %v1686
    %v1710 = vpop.f32.mrf.mxu0
    %v1711 = vadd.f32 %v1698, %v1710
    %v1712 = vpop.f32.mrf.mxu0
    %1713 = vdwg.mxu0
    %1714 = vmatpush.bf16.msra.mxu0 %v987
    %1715 = vmatpush.bf16.msra.mxu0 %v985
    %1716 = vmatpush.bf16.msra.mxu0 %v983
    %1717 = vmatpush.bf16.msra.mxu0 %v981
    %1718 = vmatpush.bf16.msra.mxu0 %v979
    %1719 = vmatpush.bf16.msra.mxu0 %v977
    %1720 = vmatpush.bf16.msra.mxu0 %v975
    %1721 = vmatpush.bf16.msra.mxu0 %v973
    %1722 = vmatmul.bf16.gmra.mxu0 %v1683
    %v1723 = vpop.f32.mrf.mxu0
    %v1724 = vadd.f32 %v897, %v1723
    %v1725 = vpop.f32.mrf.mxu0
    %1726 = vdwg.mxu0
    %1727 = vmatpush.bf16.msra.mxu0 0
    %1728 = vmatpush.bf16.msra.mxu0 0
    %1729 = vmatpush.bf16.msra.mxu0 0
    %1730 = vmatpush.bf16.msra.mxu0 0
    %1731 = vmatpush.bf16.msra.mxu0 %v995
    %1732 = vmatpush.bf16.msra.mxu0 %v993
    %1733 = vmatpush.bf16.msra.mxu0 %v991
    %1734 = vmatpush.bf16.msra.mxu0 %v989
    %1735 = vmatmul.bf16.gmra.mxu0 %v1686
    %v1736 = vpop.f32.mrf.mxu0
    %v1737 = vadd.f32 %v1724, %v1736
    %v1738 = vpop.f32.mrf.mxu0
    %1739 = vdwg.mxu0
    %v1740 = vmul.f32 %v1711, %v581
    %v1741 = vmul.f32 %v1737, %v582
    %v1742 = vtanh.pop %v1740
    %v1743 = vtanh.pop %v1741
    %v1744 = vsub.f32 %v1742, 1.0
    %v1745 = vsub.f32 %v1743, 1.0
    %v1746 = vmul.f32 %v581, %v1744
    %v1747 = vmul.f32 %v582, %v1745
    %v1748 = vadd.f32 %v1746, 1.0
    %v1749 = vadd.f32 %v1747, 1.0
    %v1750 = vmul.f32 %v1748, %v1590
    %v1751 = vmul.f32 %v1748, %v1749
    %1753 = vrot.lane.b32.xlu0 %v1751, 64
    %v1754 = vpop.permute.xlu0 %1753
    %v1756 = vadd.f32 %v1750, %v1754
    %v1757 = vtanh.pop %v1756
    %v1758 = vmul.f32 %v1749, %v1757
    %s1759 = scalar_lea.vmem [#allocation4], 160
    %v1760 = vld [vmem:[%s1759] sm:$0xff]
    %v1761 = vld [vmem:[%s1759 + $0x8] sm:$0xff]
    %v1762 = vld [vmem:[%s1759 + $0x10] sm:$0xff]
    %v1763 = vld [vmem:[%s1759 + $0x18] sm:$0xff]
    %1764 = vmatpush.bf16.msra.mxu0 %v752
    %1765 = vmatpush.bf16.msra.mxu0 %v748
    %1766 = vmatpush.bf16.msra.mxu0 %v744
    %1767 = vmatpush.bf16.msra.mxu0 %v740
    %1768 = vmatpush.bf16.msra.mxu0 %v736
    %1769 = vmatpush.bf16.msra.mxu0 %v732
    %1770 = vmatpush.bf16.msra.mxu0 %v728
    %1771 = vmatpush.bf16.msra.mxu0 %v724
    %1772 = vmatmul.bf16.gmra.mxu0 %v1683
    %v1773 = vpop.f32.mrf.mxu0
    %v1774 = vadd.f32 0.0, %v1773
    %v1775 = vpop.f32.mrf.mxu0
    %1776 = vdwg.mxu0
    %1777 = vmatpush.bf16.msra.mxu0 %v753
    %1778 = vmatpush.bf16.msra.mxu0 %v749
    %1779 = vmatpush.bf16.msra.mxu0 %v745
    %1780 = vmatpush.bf16.msra.mxu0 %v741
    %1781 = vmatpush.bf16.msra.mxu0 %v737
    %1782 = vmatpush.bf16.msra.mxu0 %v733
    %1783 = vmatpush.bf16.msra.mxu0 %v729
    %1784 = vmatpush.bf16.msra.mxu0 %v725
    %1785 = vmatmul.bf16.gmra.mxu0 %v1683
    %v1786 = vpop.f32.mrf.mxu0
    %v1787 = vadd.f32 0.0, %v1786
    %v1788 = vpop.f32.mrf.mxu0
    %1789 = vdwg.mxu0
    %1790 = vmatpush.bf16.msra.mxu0 %v754
    %1791 = vmatpush.bf16.msra.mxu0 %v750
    %1792 = vmatpush.bf16.msra.mxu0 %v746
    %1793 = vmatpush.bf16.msra.mxu0 %v742
    %1794 = vmatpush.bf16.msra.mxu0 %v738
    %1795 = vmatpush.bf16.msra.mxu0 %v734
    %1796 = vmatpush.bf16.msra.mxu0 %v730
    %1797 = vmatpush.bf16.msra.mxu0 %v726
    %1798 = vmatmul.bf16.gmra.mxu0 %v1683
    %v1799 = vpop.f32.mrf.mxu0
    %v1800 = vadd.f32 0.0, %v1799
    %v1801 = vpop.f32.mrf.mxu0
    %1802 = vdwg.mxu0
    %1803 = vmatpush.bf16.msra.mxu0 %v755
    %1804 = vmatpush.bf16.msra.mxu0 %v751
    %1805 = vmatpush.bf16.msra.mxu0 %v747
    %1806 = vmatpush.bf16.msra.mxu0 %v743
    %1807 = vmatpush.bf16.msra.mxu0 %v739
    %1808 = vmatpush.bf16.msra.mxu0 %v735
    %1809 = vmatpush.bf16.msra.mxu0 %v731
    %1810 = vmatpush.bf16.msra.mxu0 %v727
    %1811 = vmatmul.bf16.gmra.mxu0 %v1683
    %v1812 = vpop.f32.mrf.mxu0
    %v1813 = vadd.f32 0.0, %v1812
    %v1814 = vpop.f32.mrf.mxu0
    %1815 = vdwg.mxu0
    %v1816 = vadd.f32 %v1760, %v1774
    %v1817 = vadd.f32 %v1761, %v1787
    %v1818 = vadd.f32 %v1762, %v1800
    %v1819 = vadd.f32 %v1763, %v1813
    %v1820 = vmul.f32 %v1816, %v571
    %v1821 = vmul.f32 %v1817, %v572
    %v1822 = vmul.f32 %v1818, %v573
    %v1823 = vmul.f32 %v1819, %v574
    %v1824 = vtanh.pop %v1820
    %v1825 = vtanh.pop %v1821
    %v1826 = vtanh.pop %v1822
    %v1827 = vtanh.pop %v1823
    %v1828 = vsub.f32 %v1824, 1.0
    %v1829 = vsub.f32 %v1825, 1.0
    %v1830 = vsub.f32 %v1826, 1.0
    %v1831 = vsub.f32 %v1827, 1.0
    %v1832 = vmul.f32 %v571, %v1828
    %v1833 = vmul.f32 %v572, %v1829
    %v1834 = vmul.f32 %v573, %v1830
    %v1835 = vmul.f32 %v574, %v1831
    %v1836 = vadd.f32 %v1832, 1.0
    %v1837 = vadd.f32 %v1833, 1.0
    %v1838 = vadd.f32 %v1834, 1.0
    %v1839 = vadd.f32 %v1835, 1.0
    %v1840 = vmul.f32 %v1837, %v1676
    %v1841 = vmul.f32 %v1836, %v1838
    %v1842 = vadd.f32 %v1840, %v1841
    %v1843 = vtanh.pop %v1842
    %v1844 = vmul.f32 %v1839, %v1843
    %1846 = vrot.lane.b32.xlu0 %v1758, 64
    %v1847 = vpop.permute.xlu0 %1846
    %v1849 = vpack.c.bf16 %v1844, %v1844
    %v1850 = vpack.c.bf16 %v1847, %v1847
    %v1852 = vsel %vm1020, %v1850, 0
    %1854 = vmatpush.bf16.msra.mxu0 %v986
    %1855 = vmatpush.bf16.msra.mxu0 %v984
    %1856 = vmatpush.bf16.msra.mxu0 %v982
    %1857 = vmatpush.bf16.msra.mxu0 %v980
    %1858 = vmatpush.bf16.msra.mxu0 %v978
    %1859 = vmatpush.bf16.msra.mxu0 %v976
    %1860 = vmatpush.bf16.msra.mxu0 %v974
    %1861 = vmatpush.bf16.msra.mxu0 %v972
    %1862 = vmatmul.bf16.gmra.mxu0 %v1849
    %v1863 = vpop.f32.mrf.mxu0
    %v1864 = vadd.f32 %v896, %v1863
    %v1865 = vpop.f32.mrf.mxu0
    %1866 = vdwg.mxu0
    %1867 = vmatpush.bf16.msra.mxu0 0
    %1868 = vmatpush.bf16.msra.mxu0 0
    %1869 = vmatpush.bf16.msra.mxu0 0
    %1870 = vmatpush.bf16.msra.mxu0 0
    %1871 = vmatpush.bf16.msra.mxu0 %v994
    %1872 = vmatpush.bf16.msra.mxu0 %v992
    %1873 = vmatpush.bf16.msra.mxu0 %v990
    %1874 = vmatpush.bf16.msra.mxu0 %v988
    %1875 = vmatmul.bf16.gmra.mxu0 %v1852
    %v1876 = vpop.f32.mrf.mxu0
    %v1877 = vadd.f32 %v1864, %v1876
    %v1878 = vpop.f32.mrf.mxu0
    %1879 = vdwg.mxu0
    %1880 = vmatpush.bf16.msra.mxu0 %v987
    %1881 = vmatpush.bf16.msra.mxu0 %v985
    %1882 = vmatpush.bf16.msra.mxu0 %v983
    %1883 = vmatpush.bf16.msra.mxu0 %v981
    %1884 = vmatpush.bf16.msra.mxu0 %v979
    %1885 = vmatpush.bf16.msra.mxu0 %v977
    %1886 = vmatpush.bf16.msra.mxu0 %v975
    %1887 = vmatpush.bf16.msra.mxu0 %v973
    %1888 = vmatmul.bf16.gmra.mxu0 %v1849
    %v1889 = vpop.f32.mrf.mxu0
    %v1890 = vadd.f32 %v897, %v1889
    %v1891 = vpop.f32.mrf.mxu0
    %1892 = vdwg.mxu0
    %1893 = vmatpush.bf16.msra.mxu0 0
    %1894 = vmatpush.bf16.msra.mxu0 0
    %1895 = vmatpush.bf16.msra.mxu0 0
    %1896 = vmatpush.bf16.msra.mxu0 0
    %1897 = vmatpush.bf16.msra.mxu0 %v995
    %1898 = vmatpush.bf16.msra.mxu0 %v993
    %1899 = vmatpush.bf16.msra.mxu0 %v991
    %1900 = vmatpush.bf16.msra.mxu0 %v989
    %1901 = vmatmul.bf16.gmra.mxu0 %v1852
    %v1902 = vpop.f32.mrf.mxu0
    %v1903 = vadd.f32 %v1890, %v1902
    %v1904 = vpop.f32.mrf.mxu0
    %1905 = vdwg.mxu0
    %v1906 = vmul.f32 %v1877, %v581
    %v1907 = vmul.f32 %v1903, %v582
    %v1908 = vtanh.pop %v1906
    %v1909 = vtanh.pop %v1907
    %v1910 = vsub.f32 %v1908, 1.0
    %v1911 = vsub.f32 %v1909, 1.0
    %v1912 = vmul.f32 %v581, %v1910
    %v1913 = vmul.f32 %v582, %v1911
    %v1914 = vadd.f32 %v1912, 1.0
    %v1915 = vadd.f32 %v1913, 1.0
    %v1916 = vmul.f32 %v1914, %v1756
    %v1917 = vmul.f32 %v1914, %v1915
    %1919 = vrot.lane.b32.xlu0 %v1917, 64
    %v1920 = vpop.permute.xlu0 %1919
    %v1922 = vadd.f32 %v1916, %v1920
    %v1923 = vtanh.pop %v1922
    %v1924 = vmul.f32 %v1915, %v1923
    %s1925 = scalar_lea.vmem [#allocation4], 192
    %v1926 = vld [vmem:[%s1925] sm:$0xff]
    %v1927 = vld [vmem:[%s1925 + $0x8] sm:$0xff]
    %v1928 = vld [vmem:[%s1925 + $0x10] sm:$0xff]
    %v1929 = vld [vmem:[%s1925 + $0x18] sm:$0xff]
    %1930 = vmatpush.bf16.msra.mxu0 %v752
    %1931 = vmatpush.bf16.msra.mxu0 %v748
    %1932 = vmatpush.bf16.msra.mxu0 %v744
    %1933 = vmatpush.bf16.msra.mxu0 %v740
    %1934 = vmatpush.bf16.msra.mxu0 %v736
    %1935 = vmatpush.bf16.msra.mxu0 %v732
    %1936 = vmatpush.bf16.msra.mxu0 %v728
    %1937 = vmatpush.bf16.msra.mxu0 %v724
    %1938 = vmatmul.bf16.gmra.mxu0 %v1849
    %v1939 = vpop.f32.mrf.mxu0
    %v1940 = vadd.f32 0.0, %v1939
    %v1941 = vpop.f32.mrf.mxu0
    %1942 = vdwg.mxu0
    %1943 = vmatpush.bf16.msra.mxu0 %v753
    %1944 = vmatpush.bf16.msra.mxu0 %v749
    %1945 = vmatpush.bf16.msra.mxu0 %v745
    %1946 = vmatpush.bf16.msra.mxu0 %v741
    %1947 = vmatpush.bf16.msra.mxu0 %v737
    %1948 = vmatpush.bf16.msra.mxu0 %v733
    %1949 = vmatpush.bf16.msra.mxu0 %v729
    %1950 = vmatpush.bf16.msra.mxu0 %v725
    %1951 = vmatmul.bf16.gmra.mxu0 %v1849
    %v1952 = vpop.f32.mrf.mxu0
    %v1953 = vadd.f32 0.0, %v1952
    %v1954 = vpop.f32.mrf.mxu0
    %1955 = vdwg.mxu0
    %1956 = vmatpush.bf16.msra.mxu0 %v754
    %1957 = vmatpush.bf16.msra.mxu0 %v750
    %1958 = vmatpush.bf16.msra.mxu0 %v746
    %1959 = vmatpush.bf16.msra.mxu0 %v742
    %1960 = vmatpush.bf16.msra.mxu0 %v738
    %1961 = vmatpush.bf16.msra.mxu0 %v734
    %1962 = vmatpush.bf16.msra.mxu0 %v730
    %1963 = vmatpush.bf16.msra.mxu0 %v726
    %1964 = vmatmul.bf16.gmra.mxu0 %v1849
    %v1965 = vpop.f32.mrf.mxu0
    %v1966 = vadd.f32 0.0, %v1965
    %v1967 = vpop.f32.mrf.mxu0
    %1968 = vdwg.mxu0
    %1969 = vmatpush.bf16.msra.mxu0 %v755
    %1970 = vmatpush.bf16.msra.mxu0 %v751
    %1971 = vmatpush.bf16.msra.mxu0 %v747
    %1972 = vmatpush.bf16.msra.mxu0 %v743
    %1973 = vmatpush.bf16.msra.mxu0 %v739
    %1974 = vmatpush.bf16.msra.mxu0 %v735
    %1975 = vmatpush.bf16.msra.mxu0 %v731
    %1976 = vmatpush.bf16.msra.mxu0 %v727
    %1977 = vmatmul.bf16.gmra.mxu0 %v1849
    %v1978 = vpop.f32.mrf.mxu0
    %v1979 = vadd.f32 0.0, %v1978
    %v1980 = vpop.f32.mrf.mxu0
    %1981 = vdwg.mxu0
    %v1982 = vadd.f32 %v1926, %v1940
    %v1983 = vadd.f32 %v1927, %v1953
    %v1984 = vadd.f32 %v1928, %v1966
    %v1985 = vadd.f32 %v1929, %v1979
    %v1986 = vmul.f32 %v1982, %v571
    %v1987 = vmul.f32 %v1983, %v572
    %v1988 = vmul.f32 %v1984, %v573
    %v1989 = vmul.f32 %v1985, %v574
    %v1990 = vtanh.pop %v1986
    %v1991 = vtanh.pop %v1987
    %v1992 = vtanh.pop %v1988
    %v1993 = vtanh.pop %v1989
    %v1994 = vsub.f32 %v1990, 1.0
    %v1995 = vsub.f32 %v1991, 1.0
    %v1996 = vsub.f32 %v1992, 1.0
    %v1997 = vsub.f32 %v1993, 1.0
    %v1998 = vmul.f32 %v571, %v1994
    %v1999 = vmul.f32 %v572, %v1995
    %v2000 = vmul.f32 %v573, %v1996
    %v2001 = vmul.f32 %v574, %v1997
    %v2002 = vadd.f32 %v1998, 1.0
    %v2003 = vadd.f32 %v1999, 1.0
    %v2004 = vadd.f32 %v2000, 1.0
    %v2005 = vadd.f32 %v2001, 1.0
    %v2006 = vmul.f32 %v2003, %v1842
    %v2007 = vmul.f32 %v2002, %v2004
    %v2008 = vadd.f32 %v2006, %v2007
    %v2009 = vtanh.pop %v2008
    %v2010 = vmul.f32 %v2005, %v2009
    %2012 = vrot.lane.b32.xlu0 %v1924, 64
    %v2013 = vpop.permute.xlu0 %2012
    %v2015 = vpack.c.bf16 %v2010, %v2010
    %v2016 = vpack.c.bf16 %v2013, %v2013
    %v2018 = vsel %vm1020, %v2016, 0
    %2020 = vmatpush.bf16.msra.mxu0 %v986
    %2021 = vmatpush.bf16.msra.mxu0 %v984
    %2022 = vmatpush.bf16.msra.mxu0 %v982
    %2023 = vmatpush.bf16.msra.mxu0 %v980
    %2024 = vmatpush.bf16.msra.mxu0 %v978
    %2025 = vmatpush.bf16.msra.mxu0 %v976
    %2026 = vmatpush.bf16.msra.mxu0 %v974
    %2027 = vmatpush.bf16.msra.mxu0 %v972
    %2028 = vmatmul.bf16.gmra.mxu0 %v2015
    %v2029 = vpop.f32.mrf.mxu0
    %v2030 = vadd.f32 %v896, %v2029
    %v2031 = vpop.f32.mrf.mxu0
    %2032 = vdwg.mxu0
    %2033 = vmatpush.bf16.msra.mxu0 0
    %2034 = vmatpush.bf16.msra.mxu0 0
    %2035 = vmatpush.bf16.msra.mxu0 0
    %2036 = vmatpush.bf16.msra.mxu0 0
    %2037 = vmatpush.bf16.msra.mxu0 %v994
    %2038 = vmatpush.bf16.msra.mxu0 %v992
    %2039 = vmatpush.bf16.msra.mxu0 %v990
    %2040 = vmatpush.bf16.msra.mxu0 %v988
    %2041 = vmatmul.bf16.gmra.mxu0 %v2018
    %v2042 = vpop.f32.mrf.mxu0
    %v2043 = vadd.f32 %v2030, %v2042
    %v2044 = vpop.f32.mrf.mxu0
    %2045 = vdwg.mxu0
    %2046 = vmatpush.bf16.msra.mxu0 %v987
    %2047 = vmatpush.bf16.msra.mxu0 %v985
    %2048 = vmatpush.bf16.msra.mxu0 %v983
    %2049 = vmatpush.bf16.msra.mxu0 %v981
    %2050 = vmatpush.bf16.msra.mxu0 %v979
    %2051 = vmatpush.bf16.msra.mxu0 %v977
    %2052 = vmatpush.bf16.msra.mxu0 %v975
    %2053 = vmatpush.bf16.msra.mxu0 %v973
    %2054 = vmatmul.bf16.gmra.mxu0 %v2015
    %v2055 = vpop.f32.mrf.mxu0
    %v2056 = vadd.f32 %v897, %v2055
    %v2057 = vpop.f32.mrf.mxu0
    %2058 = vdwg.mxu0
    %2059 = vmatpush.bf16.msra.mxu0 0
    %2060 = vmatpush.bf16.msra.mxu0 0
    %2061 = vmatpush.bf16.msra.mxu0 0
    %2062 = vmatpush.bf16.msra.mxu0 0
    %2063 = vmatpush.bf16.msra.mxu0 %v995
    %2064 = vmatpush.bf16.msra.mxu0 %v993
    %2065 = vmatpush.bf16.msra.mxu0 %v991
    %2066 = vmatpush.bf16.msra.mxu0 %v989
    %2067 = vmatmul.bf16.gmra.mxu0 %v2018
    %v2068 = vpop.f32.mrf.mxu0
    %v2069 = vadd.f32 %v2056, %v2068
    %v2070 = vpop.f32.mrf.mxu0
    %2071 = vdwg.mxu0
    %v2072 = vmul.f32 %v2043, %v581
    %v2073 = vmul.f32 %v2069, %v582
    %v2074 = vtanh.pop %v2072
    %v2075 = vtanh.pop %v2073
    %v2076 = vsub.f32 %v2074, 1.0
    %v2077 = vsub.f32 %v2075, 1.0
    %v2078 = vmul.f32 %v581, %v2076
    %v2079 = vmul.f32 %v582, %v2077
    %v2080 = vadd.f32 %v2078, 1.0
    %v2081 = vadd.f32 %v2079, 1.0
    %v2082 = vmul.f32 %v2080, %v1922
    %v2083 = vmul.f32 %v2080, %v2081
    %2085 = vrot.lane.b32.xlu0 %v2083, 64
    %v2086 = vpop.permute.xlu0 %2085
    %v2088 = vadd.f32 %v2082, %v2086
    %v2089 = vtanh.pop %v2088
    %v2090 = vmul.f32 %v2081, %v2089
    %s2091 = scalar_lea.vmem [#allocation4], 224
    %v2092 = vld [vmem:[%s2091] sm:$0xff]
    %v2093 = vld [vmem:[%s2091 + $0x8] sm:$0xff]
    %v2094 = vld [vmem:[%s2091 + $0x10] sm:$0xff]
    %v2095 = vld [vmem:[%s2091 + $0x18] sm:$0xff]
    %2096 = vmatpush.bf16.msra.mxu0 %v752
    %2097 = vmatpush.bf16.msra.mxu0 %v748
    %2098 = vmatpush.bf16.msra.mxu0 %v744
    %2099 = vmatpush.bf16.msra.mxu0 %v740
    %2100 = vmatpush.bf16.msra.mxu0 %v736
    %2101 = vmatpush.bf16.msra.mxu0 %v732
    %2102 = vmatpush.bf16.msra.mxu0 %v728
    %2103 = vmatpush.bf16.msra.mxu0 %v724
    %2104 = vmatmul.bf16.gmra.mxu0 %v2015
    %v2105 = vpop.f32.mrf.mxu0
    %v2106 = vadd.f32 0.0, %v2105
    %v2107 = vpop.f32.mrf.mxu0
    %2108 = vdwg.mxu0
    %2109 = vmatpush.bf16.msra.mxu0 %v753
    %2110 = vmatpush.bf16.msra.mxu0 %v749
    %2111 = vmatpush.bf16.msra.mxu0 %v745
    %2112 = vmatpush.bf16.msra.mxu0 %v741
    %2113 = vmatpush.bf16.msra.mxu0 %v737
    %2114 = vmatpush.bf16.msra.mxu0 %v733
    %2115 = vmatpush.bf16.msra.mxu0 %v729
    %2116 = vmatpush.bf16.msra.mxu0 %v725
    %2117 = vmatmul.bf16.gmra.mxu0 %v2015
    %v2118 = vpop.f32.mrf.mxu0
    %v2119 = vadd.f32 0.0, %v2118
    %v2120 = vpop.f32.mrf.mxu0
    %2121 = vdwg.mxu0
    %2122 = vmatpush.bf16.msra.mxu0 %v754
    %2123 = vmatpush.bf16.msra.mxu0 %v750
    %2124 = vmatpush.bf16.msra.mxu0 %v746
    %2125 = vmatpush.bf16.msra.mxu0 %v742
    %2126 = vmatpush.bf16.msra.mxu0 %v738
    %2127 = vmatpush.bf16.msra.mxu0 %v734
    %2128 = vmatpush.bf16.msra.mxu0 %v730
    %2129 = vmatpush.bf16.msra.mxu0 %v726
    %2130 = vmatmul.bf16.gmra.mxu0 %v2015
    %v2131 = vpop.f32.mrf.mxu0
    %v2132 = vadd.f32 0.0, %v2131
    %v2133 = vpop.f32.mrf.mxu0
    %2134 = vdwg.mxu0
    %2135 = vmatpush.bf16.msra.mxu0 %v755
    %2136 = vmatpush.bf16.msra.mxu0 %v751
    %2137 = vmatpush.bf16.msra.mxu0 %v747
    %2138 = vmatpush.bf16.msra.mxu0 %v743
    %2139 = vmatpush.bf16.msra.mxu0 %v739
    %2140 = vmatpush.bf16.msra.mxu0 %v735
    %2141 = vmatpush.bf16.msra.mxu0 %v731
    %2142 = vmatpush.bf16.msra.mxu0 %v727
    %2143 = vmatmul.bf16.gmra.mxu0 %v2015
    %v2144 = vpop.f32.mrf.mxu0
    %v2145 = vadd.f32 0.0, %v2144
    %v2146 = vpop.f32.mrf.mxu0
    %2147 = vdwg.mxu0
    %v2148 = vadd.f32 %v2092, %v2106
    %v2149 = vadd.f32 %v2093, %v2119
    %v2150 = vadd.f32 %v2094, %v2132
    %v2151 = vadd.f32 %v2095, %v2145
    %v2152 = vmul.f32 %v2148, %v571
    %v2153 = vmul.f32 %v2149, %v572
    %v2154 = vmul.f32 %v2150, %v573
    %v2155 = vmul.f32 %v2151, %v574
    %v2156 = vtanh.pop %v2152
    %v2157 = vtanh.pop %v2153
    %v2158 = vtanh.pop %v2154
    %v2159 = vtanh.pop %v2155
    %v2160 = vsub.f32 %v2156, 1.0
    %v2161 = vsub.f32 %v2157, 1.0
    %v2162 = vsub.f32 %v2158, 1.0
    %v2163 = vsub.f32 %v2159, 1.0
    %v2164 = vmul.f32 %v571, %v2160
    %v2165 = vmul.f32 %v572, %v2161
    %v2166 = vmul.f32 %v573, %v2162
    %v2167 = vmul.f32 %v574, %v2163
    %v2168 = vadd.f32 %v2164, 1.0
    %v2169 = vadd.f32 %v2165, 1.0
    %v2170 = vadd.f32 %v2166, 1.0
    %v2171 = vadd.f32 %v2167, 1.0
    %v2172 = vmul.f32 %v2169, %v2008
    %v2173 = vmul.f32 %v2168, %v2170
    %v2174 = vadd.f32 %v2172, %v2173
    %v2175 = vtanh.pop %v2174
    %v2176 = vmul.f32 %v2171, %v2175
    %2178 = vrot.lane.b32.xlu0 %v2090, 64
    %v2179 = vpop.permute.xlu0 %2178
    %v2181 = vpack.c.bf16 %v2176, %v2176
    %v2182 = vpack.c.bf16 %v2179, %v2179
    %v2184 = vsel %vm1020, %v2182, 0
    %2186 = vmatpush.bf16.msra.mxu0 %v986
    %2187 = vmatpush.bf16.msra.mxu0 %v984
    %2188 = vmatpush.bf16.msra.mxu0 %v982
    %2189 = vmatpush.bf16.msra.mxu0 %v980
    %2190 = vmatpush.bf16.msra.mxu0 %v978
    %2191 = vmatpush.bf16.msra.mxu0 %v976
    %2192 = vmatpush.bf16.msra.mxu0 %v974
    %2193 = vmatpush.bf16.msra.mxu0 %v972
    %2194 = vmatmul.bf16.gmra.mxu0 %v2181
    %v2195 = vpop.f32.mrf.mxu0
    %v2196 = vadd.f32 %v896, %v2195
    %v2197 = vpop.f32.mrf.mxu0
    %2198 = vdwg.mxu0
    %2199 = vmatpush.bf16.msra.mxu0 0
    %2200 = vmatpush.bf16.msra.mxu0 0
    %2201 = vmatpush.bf16.msra.mxu0 0
    %2202 = vmatpush.bf16.msra.mxu0 0
    %2203 = vmatpush.bf16.msra.mxu0 %v994
    %2204 = vmatpush.bf16.msra.mxu0 %v992
    %2205 = vmatpush.bf16.msra.mxu0 %v990
    %2206 = vmatpush.bf16.msra.mxu0 %v988
    %2207 = vmatmul.bf16.gmra.mxu0 %v2184
    %v2208 = vpop.f32.mrf.mxu0
    %v2209 = vadd.f32 %v2196, %v2208
    %v2210 = vpop.f32.mrf.mxu0
    %2211 = vdwg.mxu0
    %2212 = vmatpush.bf16.msra.mxu0 %v987
    %2213 = vmatpush.bf16.msra.mxu0 %v985
    %2214 = vmatpush.bf16.msra.mxu0 %v983
    %2215 = vmatpush.bf16.msra.mxu0 %v981
    %2216 = vmatpush.bf16.msra.mxu0 %v979
    %2217 = vmatpush.bf16.msra.mxu0 %v977
    %2218 = vmatpush.bf16.msra.mxu0 %v975
    %2219 = vmatpush.bf16.msra.mxu0 %v973
    %2220 = vmatmul.bf16.gmra.mxu0 %v2181
    %v2221 = vpop.f32.mrf.mxu0
    %v2222 = vadd.f32 %v897, %v2221
    %v2223 = vpop.f32.mrf.mxu0
    %2224 = vdwg.mxu0
    %2225 = vmatpush.bf16.msra.mxu0 0
    %2226 = vmatpush.bf16.msra.mxu0 0
    %2227 = vmatpush.bf16.msra.mxu0 0
    %2228 = vmatpush.bf16.msra.mxu0 0
    %2229 = vmatpush.bf16.msra.mxu0 %v995
    %2230 = vmatpush.bf16.msra.mxu0 %v993
    %2231 = vmatpush.bf16.msra.mxu0 %v991
    %2232 = vmatpush.bf16.msra.mxu0 %v989
    %2233 = vmatmul.bf16.gmra.mxu0 %v2184
    %v2234 = vpop.f32.mrf.mxu0
    %v2235 = vadd.f32 %v2222, %v2234
    %v2236 = vpop.f32.mrf.mxu0
    %2237 = vdwg.mxu0
    %v2238 = vmul.f32 %v2209, %v581
    %v2239 = vmul.f32 %v2235, %v582
    %v2240 = vtanh.pop %v2238
    %v2241 = vtanh.pop %v2239
    %v2242 = vsub.f32 %v2240, 1.0
    %v2243 = vsub.f32 %v2241, 1.0
    %v2244 = vmul.f32 %v581, %v2242
    %v2245 = vmul.f32 %v582, %v2243
    %v2246 = vadd.f32 %v2244, 1.0
    %v2247 = vadd.f32 %v2245, 1.0
    %v2248 = vmul.f32 %v2246, %v2088
    %v2249 = vmul.f32 %v2246, %v2247
    %2251 = vrot.lane.b32.xlu0 %v2249, 64
    %v2252 = vpop.permute.xlu0 %2251
    %v2254 = vadd.f32 %v2248, %v2252
    %v2255 = vtanh.pop %v2254
    %v2256 = vmul.f32 %v2247, %v2255
    %v2257 = vld [vmem:[%s6] sm:$0xff]
    %v2258 = vld [vmem:[%s6 + $0x8] sm:$0xff]
    %v2259 = vld [vmem:[%s6 + $0x10] sm:$0xff]
    %v2260 = vld [vmem:[%s6 + $0x18] sm:$0xff]
    %v2261 = vld [vmem:[%s6 + $0x20] sm:$0xff]
    %v2262 = vld [vmem:[%s6 + $0x28] sm:$0xff]
    %v2263 = vld [vmem:[%s6 + $0x30] sm:$0xff]
    %v2264 = vld [vmem:[%s6 + $0x38] sm:$0xff]
    %v2265 = vld [vmem:[%s7] sm:$0x1]
    %v2267 = vperm.slane %v2265, 0
    %2270 = vrot.lane.b32.xlu0 %v2256, 64
    %v2271 = vpop.permute.xlu0 %2270
    %v2272 = vsel %vm1020, %v2271, 0
    %2274 = vmatpush.msra.mxu0 0.0
    %2275 = vmatpush.msra.mxu0 0.0
    %2276 = vmatpush.msra.mxu0 0.0
    %2277 = vmatpush.msra.mxu0 0.0
    %2278 = vmatpush.msra.mxu0 0.0
    %2279 = vmatpush.msra.mxu0 0.0
    %2280 = vmatpush.msra.mxu0 0.0
    %2281 = vmatpush.msra.mxu0 0.0
    %2282 = vmatpush.msra.mxu0 %v2264
    %2283 = vmatpush.msra.mxu0 %v2263
    %2284 = vmatpush.msra.mxu0 %v2262
    %2285 = vmatpush.msra.mxu0 %v2261
    %2286 = vmatpush.msra.mxu0 %v2260
    %2287 = vmatpush.msra.mxu0 %v2259
    %2288 = vmatpush.msra.mxu0 %v2258
    %2289 = vmatpush.msra.mxu0 %v2257
    %2290 = vmatmul.f32.gmra.mxu0 %v2272
    %v2291 = vpop.f32.mrf.mxu0
    %v2292 = vadd.f32 %v2267, %v2291
    %2293 = vdwg.mxu0
    %v2294 = vmax.f32 %v2292, 0.0
    %v2295 = vld [vmem:[%s8] sm:$0xff]
    %v2296 = vld [vmem:[%s8 + $0x8] sm:$0xff]
    %v2297 = vld [vmem:[%s8 + $0x10] sm:$0xff]
    %v2298 = vld [vmem:[%s8 + $0x18] sm:$0xff]
    %v2299 = vld [vmem:[%s9] sm:$0x1]
    %v2301 = vperm.slane %v2299, 0
    %vm2303 = vcmask 261120
    %v2305 = vsel %vm2303, %v2294, 0
    %2307 = vmatpush.msra.mxu0 0.0
    %2308 = vmatpush.msra.mxu0 0.0
    %2309 = vmatpush.msra.mxu0 0.0
    %2310 = vmatpush.msra.mxu0 0.0
    %2311 = vmatpush.msra.mxu0 0.0
    %2312 = vmatpush.msra.mxu0 0.0
    %2313 = vmatpush.msra.mxu0 0.0
    %2314 = vmatpush.msra.mxu0 0.0
    %2315 = vmatpush.msra.mxu0 0.0
    %2316 = vmatpush.msra.mxu0 0.0
    %2317 = vmatpush.msra.mxu0 0.0
    %2318 = vmatpush.msra.mxu0 0.0
    %2319 = vmatpush.msra.mxu0 %v2298
    %2320 = vmatpush.msra.mxu0 %v2297
    %2321 = vmatpush.msra.mxu0 %v2296
    %2322 = vmatpush.msra.mxu0 %v2295
    %2323 = vmatmul.f32.gmra.mxu0 %v2305
    %v2324 = vpop.f32.mrf.mxu0
    %v2325 = vadd.f32 %v2301, %v2324
    %2326 = vdwg.mxu0
    %vm2327 = vcmask 33792
    %2328 = vst.msk [vmem:[#allocation6] sm:$0x3] %vm2327, %v2325
    // Predicated region
    $region42: #{lstm_baseline_forward.1} parent=1 // pred_check
      _
    $region43: #{lstm_baseline_forward.1} parent=1 // pred_check_branch
      %2330 = sbr.rel (0) target = $region45
    $region44: #{lstm_baseline_forward.1} parent=1 // pred_region
      %2332 = vsyncadd [#allocation7], 0
      %s2334 = sshll.u32 [#allocation6], 4
      %s2335 = int_to_ptr.vmem [resolvable:$true] %s2334
      %s2336 = sshll.u32 %s10, 4
      %s2337 = int_to_ptr.hbm [resolvable:$true] %s2336
      %2339 = dma.vmem_to_hbm [thread:$0]  %s2335, 32, %s2337, [#allocation7]
    $region45: #{lstm_baseline_forward.1} parent=1 // pred_fallthru
      _
    // Predicated region
    $region46: #{lstm_baseline_forward.1} parent=1 // pred_check
      _
    $region47: #{lstm_baseline_forward.1} parent=1 // pred_check_branch
      %2341 = sbr.rel (0) target = $region49
    $region48: #{lstm_baseline_forward.1} parent=1 // pred_region
      %2343 = dma.done [#allocation7], 32
    $region49: #{lstm_baseline_forward.1} parent=1 // pred_fallthru
      _
    %2344 = vsyncpa [#allocation7], 1
  %2345 = vsyncmov [#allocation5]
  %s2346 = vpop.sfrf %2345
  %p2347 = scmp.eq.s32.totalorder %s2346, 0
  %p2348 = pneg %p2347
  %2350 = shalt.err (%p2348)
  %s2351 = scalar_lea.sflag [#allocation5], 1
  %2352 = vsyncmov %s2351
  %s2353 = vpop.sfrf %2352
  %p2354 = scmp.eq.s32.totalorder %s2353, 0
  %p2355 = pneg %p2354
  %2357 = shalt.err (%p2355)

</llo_original>
